<compile_context>
chip_gen: v7x
topology: tpu7x:2x2x1
jax: 0.10.0
libtpu: 0.0.40
codegen_flags: <defaults>
</compile_context>

<pallas_src>
import math
import functools

import jax
import jax.numpy as jnp
from jax.experimental import pallas as pl
from jax.experimental.pallas import tpu as pltpu


# ----------------------------------------------------------------------------
# In-kernel helpers
# ----------------------------------------------------------------------------
def _dw3x3(x, w, b, W, masks, relu):
    """3x3 depthwise conv (stride 1, 'same') on a channels-first (C, H*W) tile.

    Shear decomposition: 2 column rolls + 2 row rolls (XLU) and 4 border-mask
    multiplies instead of 8 rolls with per-tap masks.  `w` is tap-major
    (9, C, 1) with tap t = ky*3 + kx; `b` is the folded-BN bias (C, 1).
    """
    HW = x.shape[-1]
    m_l, m_r, m_t, m_b = masks                       # (1, HW) f32, hoisted
    xl = pltpu.roll(x, 1, axis=1) * m_l              # source pixel p-1 (dx=-1)
    xr = pltpu.roll(x, HW - 1, axis=1) * m_r         # source pixel p+1 (dx=+1)
    r_top = xl * w[0] + x * w[1] + xr * w[2]         # source row y-1
    r_mid = xl * w[3] + x * w[4] + xr * w[5]         # source row y
    r_bot = xl * w[6] + x * w[7] + xr * w[8]         # source row y+1
    acc = (r_mid
           + pltpu.roll(r_top, W, axis=1) * m_t      # shift down by one row
           + pltpu.roll(r_bot, HW - W, axis=1) * m_b # shift up by one row
           + b)
    if relu:
        acc = jnp.clip(acc, 0.0, 6.0)
    return acc


# ----------------------------------------------------------------------------
# Fused GhostBottleneck kernel (one grid step per block of bb batch elements)
# ----------------------------------------------------------------------------
def _ghost_bottleneck_kernel(
        x_ref,
        g1_pw_w_ref, g1_pw_b_ref, g1_dw_w_ref, g1_dw_b_ref,
        se_w1a_ref, se_w1b_ref, se_w2_ref,
        g2_pw_wa_ref, g2_pw_wb_ref, g2_pw_b_ref, g2_dw_w_ref, g2_dw_b_ref,
        o_ref,
        *, H, W, hidden, oup):
    bb = x_ref.shape[0]
    HW = H * W
    c1 = g1_pw_w_ref.shape[0]
    c2 = g2_pw_wa_ref.shape[0]

    # ---- border masks: built once per grid step, shared by both dw convs
    #      and all bb images (hoisted out of _dw3x3). ----
    p_idx = jax.lax.broadcasted_iota(jnp.int32, (1, HW), 1)
    col = p_idx % W
    masks = ((col >= 1).astype(jnp.float32),          # source col-1 in range
             (col <= W - 2).astype(jnp.float32),      # source col+1 in range
             (p_idx >= W).astype(jnp.float32),        # source row-1 in range
             (p_idx < HW - W).astype(jnp.float32))    # source row+1 in range

    # ---- hoist all weight loads once per grid step ----
    g1_pw_w = g1_pw_w_ref[...]
    g1_pw_b = g1_pw_b_ref[...]
    g1_dw_w = g1_dw_w_ref[...]
    g1_dw_b = g1_dw_b_ref[...]
    se_w1a = se_w1a_ref[...]
    se_w1b = se_w1b_ref[...]
    se_w2 = se_w2_ref[...]
    g2_pw_wa = g2_pw_wa_ref[...]
    g2_pw_wb = g2_pw_wb_ref[...]
    g2_pw_b = g2_pw_b_ref[...]
    g2_dw_w = g2_dw_w_ref[...]
    g2_dw_b = g2_dw_b_ref[...]

    # ---- bb independent per-image chains, unrolled so the scheduler can
    #      overlap them and hide MXU/EUP/XLU latency. ----
    for b in range(bb):
        x = x_ref[b].astype(jnp.float32)               # (Cin, HW); also residual

        # ghost1: 1x1 conv (+folded BN) + ReLU6, then 3x3 dw conv (+BN) + ReLU6
        x1 = jnp.dot(g1_pw_w, x, preferred_element_type=jnp.float32)
        x1 = jnp.clip(x1 + g1_pw_b, 0.0, 6.0)          # (c1, HW)
        x2 = _dw3x3(x1, g1_dw_w, g1_dw_b, W, masks, relu=True)
        x2 = x2[: hidden - c1, :]                      # concat([x1,x2])[:hidden]

        # SE: pool -> FC -> ReLU6 -> FC -> Sigmoid.  The concatenated hidden
        # activation is never materialized: the pooled halves feed split FC1
        # weights (no VMEM scratch round-trip).
        g_a = jnp.mean(x1, axis=1, keepdims=True)      # (c1, 1)
        g_b = jnp.mean(x2, axis=1, keepdims=True)      # (hidden-c1, 1)
        z = (jnp.dot(se_w1a, g_a, preferred_element_type=jnp.float32)
             + jnp.dot(se_w1b, g_b, preferred_element_type=jnp.float32))
        z = jnp.clip(z, 0.0, 6.0)                      # (cr, 1)
        s = jnp.dot(se_w2, z, preferred_element_type=jnp.float32)
        s = 1.0 / (1.0 + jnp.exp(-s))                  # sigmoid, (hidden, 1)

        # ghost2: SE gate applied per channel-half directly on the matmul
        # inputs; split pointwise weights realize the concat as two matmuls.
        # TODO(synk): folding s into the pointwise-weight columns needs a
        #             sublane->lane relayout of s; at hidden=16 the 4-vreg VPU
        #             scale below is cheaper, so the gate stays on the inputs.
        x1s = x1 * s[:c1, :]
        x2s = x2 * s[c1:hidden, :]
        y1 = (jnp.dot(g2_pw_wa, x1s, preferred_element_type=jnp.float32)
              + jnp.dot(g2_pw_wb, x2s, preferred_element_type=jnp.float32)
              + g2_pw_b)                               # (c2, HW), no ReLU
        y2 = _dw3x3(y1, g2_dw_w, g2_dw_b, W, masks, relu=False)

        # concat (channel-half writes) + identity shortcut fused into the store.
        # TODO(synk): a single dense (oup, HW) store needs a sublane-unaligned
        #             in-register concat; kept as two half-tile stores for
        #             lowering robustness.
        o_ref[b, 0:c2, :] = (y1 + x[0:c2, :]).astype(o_ref.dtype)
        o_ref[b, c2:oup, :] = (y2[: oup - c2, :] + x[c2:oup, :]).astype(o_ref.dtype)


# ----------------------------------------------------------------------------
# Wrapper: NCHW in / NCHW out, only free reshapes (no transposes, no pad)
# ----------------------------------------------------------------------------
def _pick_batch_block(n):
    """Largest per-step batch <= 8 that divides n while keeping >= 2 grid
    steps (so the batch grid can still shard across TensorCores on v7x)."""
    best = 1
    for cand in range(2, min(n, 8) + 1):
        if n % cand == 0 and n // cand >= 2:
            best = cand
    return best


def ghost_bottleneck(x_nchw, params, batch_block=None):
    N, Cin, H, W = x_nchw.shape
    HW = H * W
    g1, g2, se = params["ghost1"], params["ghost2"], params["se"]
    hidden, oup = g1["oup"], g2["oup"]
    c1 = g1["pw_w"].shape[0]
    c2 = g2["pw_w"].shape[0]
    cr = se["w1"].shape[0]
    new1 = g1["dw_w"].shape[1]
    new2 = g2["dw_w"].shape[1]

    # stride == 1, identity-shortcut, ratio == 2 configuration only.
    assert Cin == oup, "identity shortcut requires stride == 1 and inp == oup"
    assert 0 < hidden - c1 <= new1 and 0 < oup - c2 <= new2, "ratio == 2 assumed"
    assert HW % 128 == 0, "lane extent must be a multiple of 128 (no padded lanes)"

    bb = _pick_batch_block(N) if batch_block is None else batch_block
    assert N % bb == 0

    x = x_nchw.reshape(N, Cin, HW)          # free (layout-preserving) reshape

    # Split SE FC1 / ghost2 pointwise weights into x1/x2 channel halves so the
    # concatenated hidden activation never needs to exist inside the kernel.
    se_w1a, se_w1b = se["w1"][:, :c1], se["w1"][:, c1:hidden]
    g2_wa, g2_wb = g2["pw_w"][:, :c1], g2["pw_w"][:, c1:hidden]

    def full(shape):
        zero = (0,) * len(shape)
        return pl.BlockSpec(shape, lambda n, _z=zero: _z)

    kernel = functools.partial(_ghost_bottleneck_kernel, H=H, W=W,
                               hidden=hidden, oup=oup)
    out = pl.pallas_call(
        kernel,
        out_shape=jax.ShapeDtypeStruct((N, oup, HW), x_nchw.dtype),
        grid=(N // bb,),
        in_specs=[
            pl.BlockSpec((bb, Cin, HW), lambda n: (n, 0, 0)),           # x (+residual)
            full((c1, Cin)), full((c1, 1)), full((9, new1, 1)), full((new1, 1)),
            full((cr, c1)), full((cr, hidden - c1)), full((hidden, cr)),
            full((c2, c1)), full((c2, hidden - c1)), full((c2, 1)),
            full((9, new2, 1)), full((new2, 1)),
        ],
        out_specs=pl.BlockSpec((bb, oup, HW), lambda n: (n, 0, 0)),
        compiler_params=pltpu.CompilerParams(
            # TODO(synk): on v7x consider pltpu.CORE_PARALLEL on this axis to
            #             force explicit sharding across the two TensorCores.
            dimension_semantics=("parallel",)),
    )(
        x,
        g1["pw_w"], g1["pw_b"], g1["dw_w"], g1["dw_b"],
        se_w1a, se_w1b, se["w2"],
        g2_wa, g2_wb, g2["pw_b"], g2["dw_w"], g2["dw_b"],
    )
    return out.reshape(N, oup, H, W)


# ----------------------------------------------------------------------------
# Deterministic parameter init (BN folded, scale baked into conv weights)
# ----------------------------------------------------------------------------
def _fold_bn(gamma, beta, mean, var, eps=1e-5):
    scale = gamma / jnp.sqrt(var + eps)
    return scale, beta - mean * scale


def _init_bn(key, c):
    k1, k2, k3, k4 = jax.random.split(key, 4)
    gamma = 1.0 + 0.1 * jax.random.normal(k1, (c,), jnp.float32)
    beta = 0.1 * jax.random.normal(k2, (c,), jnp.float32)
    mean = 0.1 * jax.random.normal(k3, (c,), jnp.float32)
    var = 1.0 + 0.1 * jnp.abs(jax.random.normal(k4, (c,), jnp.float32))
    return _fold_bn(gamma, beta, mean, var)


def init_ghost_params(key, inp, oup, dw_size=3, ratio=2):
    init_c = math.ceil(oup / ratio)
    new_c = init_c * (ratio - 1)                 # == init_c for ratio=2
    k1, k2, k3, k4 = jax.random.split(key, 4)
    # 1x1 conv weight, PyTorch (out, in) layout; BN scale baked in, bias kept.
    pw_w = 0.1 * jax.random.normal(k1, (init_c, inp), jnp.float32)
    pw_scale, pw_bias = _init_bn(k2, init_c)
    pw_w = pw_w * pw_scale[:, None]
    # 3x3 depthwise weight, (C, 9) -> tap-major (9, C, 1); BN scale baked in.
    dw_w = 0.1 * jax.random.normal(k3, (new_c, dw_size * dw_size), jnp.float32)
    dw_scale, dw_bias = _init_bn(k4, new_c)
    dw_w = (dw_w * dw_scale[:, None]).T.reshape(dw_size * dw_size, new_c, 1)
    return dict(pw_w=pw_w, pw_b=pw_bias.reshape(init_c, 1),
                dw_w=dw_w, dw_b=dw_bias.reshape(new_c, 1),
                oup=oup)


def init_bottleneck_params(key, inp, hidden_dim, oup, reduction=4):
    k1, k2, k3, k4 = jax.random.split(key, 4)
    return {
        "ghost1": init_ghost_params(k1, inp, hidden_dim),
        "ghost2": init_ghost_params(k2, hidden_dim, oup),
        "se": {
            # nn.Linear weight layout (out, in)
            "w1": 0.2 * jax.random.normal(k3, (hidden_dim // reduction, hidden_dim), jnp.float32),
            "w2": 0.2 * jax.random.normal(k4, (hidden_dim, hidden_dim // reduction), jnp.float32),
        },
    }


# ----------------------------------------------------------------------------
# Pure-JAX reference (same folded params), used as a correctness check
# ----------------------------------------------------------------------------
def _reference(x_nchw, params, H, W):
    N, Cin, _, _ = x_nchw.shape
    HW = H * W
    x = x_nchw.reshape(N, Cin, HW).astype(jnp.float32)

    def dw3x3_ref(x_flat, dw_w, dw_b):
        n, c, _ = x_flat.shape
        xs = x_flat.reshape(n, c, H, W)
        xp = jnp.pad(xs, ((0, 0), (0, 0), (1, 1), (1, 1)))
        acc = jnp.zeros_like(xs)
        for ky in range(3):
            for kx in range(3):
                t = ky * 3 + kx
                acc = acc + xp[:, :, ky:ky + H, kx:kx + W] * dw_w[t].reshape(1, c, 1, 1)
        acc = acc + dw_b.reshape(1, c, 1, 1)
        return acc.reshape(n, c, HW)

    def ghost_ref(h, p, relu):
        x1 = jnp.einsum('oc,ncp->nop', p["pw_w"], h) + p["pw_b"][None]
        if relu:
            x1 = jnp.clip(x1, 0.0, 6.0)
        x2 = dw3x3_ref(x1, p["dw_w"], p["dw_b"])
        if relu:
            x2 = jnp.clip(x2, 0.0, 6.0)
        return jnp.concatenate([x1, x2], axis=1)[:, :p["oup"], :]

    def se_ref(h, se):
        g = jnp.mean(h, axis=2)                       # (N, hidden)
        z = jnp.clip(g @ se["w1"].T, 0.0, 6.0)
        s = 1.0 / (1.0 + jnp.exp(-(z @ se["w2"].T)))
        return h * s[:, :, None]

    h = ghost_ref(x, params["ghost1"], relu=True)
    h = se_ref(h, params["se"])
    h = ghost_ref(h, params["ghost2"], relu=False)
    out = h + x
    return out.reshape(N, -1, H, W)


# ----------------------------------------------------------------------------
if __name__ == "__main__":
    key = jax.random.PRNGKey(0)
    k_x, k_x2, k_p = jax.random.split(key, 3)

    # GhostBottleneck(inp=8, hidden_dim=16, oup=8, kernel_size=3, stride=1, use_se=True)
    inp, H, W = 8, 16, 16
    hidden_dim, oup = 16, 8
    params = init_bottleneck_params(k_p, inp, hidden_dim, oup)

    # Case 1: N=2  -> bb=1, grid=2 (keeps both TCs busy on v7x)
    x = jax.random.normal(k_x, (2, inp, H, W), jnp.float32)     # NCHW, like PyTorch
    out = jax.block_until_ready(ghost_bottleneck(x, params))
    assert out.shape == (2, oup, H, W), out.shape
    assert bool(jnp.all(jnp.isfinite(out)))
    ref = _reference(x, params, H, W)
    assert bool(jnp.allclose(out, ref, atol=1e-2, rtol=1e-2)), \
        float(jnp.max(jnp.abs(out - ref)))

    # Case 2: N=4 -> bb=2, grid=2 (exercises the per-step batching path)
    x4 = jax.random.normal(k_x2, (4, inp, H, W), jnp.float32)
    out4 = jax.block_until_ready(ghost_bottleneck(x4, params))
    ref4 = _reference(x4, params, H, W)
    assert bool(jnp.allclose(out4, ref4, atol=1e-2, rtol=1e-2)), \
        float(jnp.max(jnp.abs(out4 - ref4)))

    print("KERNEL_OK")
</pallas_src>

<mosaic_0001>
module attributes {stable_mosaic.version = 11 : i64} {
  func.func @_ghost_bottleneck_kernel(%arg0: i32, %arg1: memref<1x8x256xf32, #tpu.memory_space<vmem>>, %arg2: memref<8x8xf32, #tpu.memory_space<vmem>>, %arg3: memref<8x1xf32, #tpu.memory_space<vmem>>, %arg4: memref<9x8x1xf32, #tpu.memory_space<vmem>>, %arg5: memref<8x1xf32, #tpu.memory_space<vmem>>, %arg6: memref<4x8xf32, #tpu.memory_space<vmem>>, %arg7: memref<4x8xf32, #tpu.memory_space<vmem>>, %arg8: memref<16x4xf32, #tpu.memory_space<vmem>>, %arg9: memref<4x8xf32, #tpu.memory_space<vmem>>, %arg10: memref<4x8xf32, #tpu.memory_space<vmem>>, %arg11: memref<4x1xf32, #tpu.memory_space<vmem>>, %arg12: memref<9x4x1xf32, #tpu.memory_space<vmem>>, %arg13: memref<4x1xf32, #tpu.memory_space<vmem>>, %arg14: memref<1x8x256xf32, #tpu.memory_space<vmem>>) attributes {dimension_semantics = [#tpu.dimension_semantics<parallel>], iteration_bounds = array<i64: 2>, scalar_prefetch = 0 : i64, scratch_operands = 0 : i64, tpu.core_type = #tpu.core_type<tc>, window_params = [{transform_indices = @transform_0, window_bounds = array<i64: 1, 8, 256>}, {pipeline_mode = #tpu.pipeline_mode<synchronous>, transform_indices = @transform_1, window_bounds = array<i64: 8, 8>}, {pipeline_mode = #tpu.pipeline_mode<synchronous>, transform_indices = @transform_2, window_bounds = array<i64: 8, 1>}, {pipeline_mode = #tpu.pipeline_mode<synchronous>, transform_indices = @transform_3, window_bounds = array<i64: 9, 8, 1>}, {pipeline_mode = #tpu.pipeline_mode<synchronous>, transform_indices = @transform_4, window_bounds = array<i64: 8, 1>}, {pipeline_mode = #tpu.pipeline_mode<synchronous>, transform_indices = @transform_5, window_bounds = array<i64: 4, 8>}, {pipeline_mode = #tpu.pipeline_mode<synchronous>, transform_indices = @transform_6, window_bounds = array<i64: 4, 8>}, {pipeline_mode = #tpu.pipeline_mode<synchronous>, transform_indices = @transform_7, window_bounds = array<i64: 16, 4>}, {pipeline_mode = #tpu.pipeline_mode<synchronous>, transform_indices = @transform_8, window_bounds = array<i64: 4, 8>}, {pipeline_mode = #tpu.pipeline_mode<synchronous>, transform_indices = @transform_9, window_bounds = array<i64: 4, 8>}, {pipeline_mode = #tpu.pipeline_mode<synchronous>, transform_indices = @transform_10, window_bounds = array<i64: 4, 1>}, {pipeline_mode = #tpu.pipeline_mode<synchronous>, transform_indices = @transform_11, window_bounds = array<i64: 9, 4, 1>}, {pipeline_mode = #tpu.pipeline_mode<synchronous>, transform_indices = @transform_12, window_bounds = array<i64: 4, 1>}, {transform_indices = @transform_13, window_bounds = array<i64: 1, 8, 256>}]} {
    %0 = tpu.iota {dimensions = array<i32: 1>} : vector<1x256xi32>
    %c16_i32 = arith.constant 16 : i32
    %c0_i32 = arith.constant 0 : i32
    %1 = arith.cmpi eq, %c16_i32, %c0_i32 : i32
    %c1_i32 = arith.constant 1 : i32
    %2 = arith.select %1, %c1_i32, %c16_i32 : i32
    %3 = vector.broadcast %2 : i32 to vector<1x256xi32>
    %4 = arith.remsi %0, %3 : vector<1x256xi32>
    %c0_i32_0 = arith.constant 0 : i32
    %5 = vector.broadcast %c0_i32_0 : i32 to vector<1x256xi32>
    %6 = arith.cmpi ne, %4, %5 : vector<1x256xi32>
    %c0_i32_1 = arith.constant 0 : i32
    %7 = vector.broadcast %c0_i32_1 : i32 to vector<1x256xi32>
    %8 = arith.cmpi slt, %4, %7 : vector<1x256xi32>
    %c0_i32_2 = arith.constant 0 : i32
    %9 = arith.cmpi slt, %2, %c0_i32_2 : i32
    %10 = vector.broadcast %9 : i1 to vector<1x256xi1>
    %11 = vector.broadcast %10 : vector<1x256xi1> to vector<1x256xi1>
    %12 = arith.xori %8, %11 : vector<1x256xi1>
    %13 = arith.andi %12, %6 : vector<1x256xi1>
    %14 = vector.broadcast %2 : i32 to vector<1x256xi32>
    %15 = arith.addi %4, %14 : vector<1x256xi32>
    %16 = arith.select %13, %15, %4 : vector<1x256xi1>, vector<1x256xi32>
    %c1_i32_3 = arith.constant 1 : i32
    %17 = vector.broadcast %c1_i32_3 : i32 to vector<1x256xi32>
    %18 = arith.cmpi sge, %16, %17 : vector<1x256xi32>
    %19 = arith.extui %18 : vector<1x256xi1> to vector<1x256xi32>
    %20 = arith.sitofp %19 : vector<1x256xi32> to vector<1x256xf32>
    %c14_i32 = arith.constant 14 : i32
    %21 = vector.broadcast %c14_i32 : i32 to vector<1x256xi32>
    %22 = arith.cmpi sle, %16, %21 : vector<1x256xi32>
    %23 = arith.extui %22 : vector<1x256xi1> to vector<1x256xi32>
    %24 = arith.sitofp %23 : vector<1x256xi32> to vector<1x256xf32>
    %c16_i32_4 = arith.constant 16 : i32
    %25 = vector.broadcast %c16_i32_4 : i32 to vector<1x256xi32>
    %26 = arith.cmpi sge, %0, %25 : vector<1x256xi32>
    %27 = arith.extui %26 : vector<1x256xi1> to vector<1x256xi32>
    %28 = arith.sitofp %27 : vector<1x256xi32> to vector<1x256xf32>
    %c240_i32 = arith.constant 240 : i32
    %29 = vector.broadcast %c240_i32 : i32 to vector<1x256xi32>
    %30 = arith.cmpi slt, %0, %29 : vector<1x256xi32>
    %31 = arith.extui %30 : vector<1x256xi1> to vector<1x256xi32>
    %32 = arith.sitofp %31 : vector<1x256xi32> to vector<1x256xf32>
    %c0 = arith.constant 0 : index
    %c0_5 = arith.constant 0 : index
    %33 = vector.load %arg2[%c0, %c0_5] : memref<8x8xf32, #tpu.memory_space<vmem>>, vector<8x8xf32>
    %c0_6 = arith.constant 0 : index
    %c0_7 = arith.constant 0 : index
    %34 = vector.load %arg3[%c0_6, %c0_7] : memref<8x1xf32, #tpu.memory_space<vmem>>, vector<8x1xf32>
    %c0_8 = arith.constant 0 : index
    %c0_9 = arith.constant 0 : index
    %c0_10 = arith.constant 0 : index
    %35 = vector.load %arg4[%c0_8, %c0_9, %c0_10] : memref<9x8x1xf32, #tpu.memory_space<vmem>>, vector<9x8x1xf32>
    %c0_11 = arith.constant 0 : index
    %c0_12 = arith.constant 0 : index
    %36 = vector.load %arg5[%c0_11, %c0_12] : memref<8x1xf32, #tpu.memory_space<vmem>>, vector<8x1xf32>
    %c0_13 = arith.constant 0 : index
    %c0_14 = arith.constant 0 : index
    %37 = vector.load %arg6[%c0_13, %c0_14] : memref<4x8xf32, #tpu.memory_space<vmem>>, vector<4x8xf32>
    %c0_15 = arith.constant 0 : index
    %c0_16 = arith.constant 0 : index
    %38 = vector.load %arg7[%c0_15, %c0_16] : memref<4x8xf32, #tpu.memory_space<vmem>>, vector<4x8xf32>
    %c0_17 = arith.constant 0 : index
    %c0_18 = arith.constant 0 : index
    %39 = vector.load %arg8[%c0_17, %c0_18] : memref<16x4xf32, #tpu.memory_space<vmem>>, vector<16x4xf32>
    %c0_19 = arith.constant 0 : index
    %c0_20 = arith.constant 0 : index
    %40 = vector.load %arg9[%c0_19, %c0_20] : memref<4x8xf32, #tpu.memory_space<vmem>>, vector<4x8xf32>
    %c0_21 = arith.constant 0 : index
    %c0_22 = arith.constant 0 : index
    %41 = vector.load %arg10[%c0_21, %c0_22] : memref<4x8xf32, #tpu.memory_space<vmem>>, vector<4x8xf32>
    %c0_23 = arith.constant 0 : index
    %c0_24 = arith.constant 0 : index
    %42 = vector.load %arg11[%c0_23, %c0_24] : memref<4x1xf32, #tpu.memory_space<vmem>>, vector<4x1xf32>
    %c0_25 = arith.constant 0 : index
    %c0_26 = arith.constant 0 : index
    %c0_27 = arith.constant 0 : index
    %43 = vector.load %arg12[%c0_25, %c0_26, %c0_27] : memref<9x4x1xf32, #tpu.memory_space<vmem>>, vector<9x4x1xf32>
    %c0_28 = arith.constant 0 : index
    %c0_29 = arith.constant 0 : index
    %44 = vector.load %arg13[%c0_28, %c0_29] : memref<4x1xf32, #tpu.memory_space<vmem>>, vector<4x1xf32>
    %c0_30 = arith.constant 0 : index
    %c0_31 = arith.constant 0 : index
    %c0_32 = arith.constant 0 : index
    %45 = vector.load %arg1[%c0_30, %c0_31, %c0_32] : memref<1x8x256xf32, #tpu.memory_space<vmem>>, vector<1x8x256xf32>
    %46 = vector.shape_cast %45 : vector<1x8x256xf32> to vector<8x256xf32>
    %cst = arith.constant dense<0.000000e+00> : vector<8x256xf32>
    %47 = tpu.matmul %33, %46, %cst {dimension_numbers = #tpu.dot_dimension_numbers<[1], [0], [0], [1], [0, 0, 1, 1], [], []>} : vector<8x8xf32>, vector<8x256xf32>, vector<8x256xf32> -> vector<8x256xf32>
    %48 = vector.broadcast %34 : vector<8x1xf32> to vector<8x256xf32>
    %49 = arith.addf %47, %48 : vector<8x256xf32>
    %cst_33 = arith.constant 0.000000e+00 : f32
    %cst_34 = arith.constant 6.000000e+00 : f32
    %50 = vector.broadcast %cst_33 : f32 to vector<8x256xf32>
    %51 = arith.maximumf %50, %49 : vector<8x256xf32>
    %52 = vector.broadcast %cst_34 : f32 to vector<8x256xf32>
    %53 = arith.minimumf %52, %51 : vector<8x256xf32>
    %c1_i32_35 = arith.constant 1 : i32
    %54 = tpu.dynamic_rotate %53 by %c1_i32_35 dim 1 : vector<8x256xf32>, i32 -> vector<8x256xf32>
    %55 = vector.broadcast %20 : vector<1x256xf32> to vector<8x256xf32>
    %56 = arith.mulf %54, %55 : vector<8x256xf32>
    %c255_i32 = arith.constant 255 : i32
    %57 = tpu.dynamic_rotate %53 by %c255_i32 dim 1 : vector<8x256xf32>, i32 -> vector<8x256xf32>
    %58 = vector.broadcast %24 : vector<1x256xf32> to vector<8x256xf32>
    %59 = arith.mulf %57, %58 : vector<8x256xf32>
    %60 = vector.extract_strided_slice %35 {offsets = [0, 0, 0], sizes = [1, 8, 1], strides = [1, 1, 1]} : vector<9x8x1xf32> to vector<1x8x1xf32>
    %61 = vector.shape_cast %60 : vector<1x8x1xf32> to vector<8x1xf32>
    %62 = vector.broadcast %61 : vector<8x1xf32> to vector<8x256xf32>
    %63 = arith.mulf %56, %62 : vector<8x256xf32>
    %64 = vector.extract_strided_slice %35 {offsets = [1, 0, 0], sizes = [1, 8, 1], strides = [1, 1, 1]} : vector<9x8x1xf32> to vector<1x8x1xf32>
    %65 = vector.shape_cast %64 : vector<1x8x1xf32> to vector<8x1xf32>
    %66 = vector.broadcast %65 : vector<8x1xf32> to vector<8x256xf32>
    %67 = arith.mulf %53, %66 : vector<8x256xf32>
    %68 = arith.addf %63, %67 : vector<8x256xf32>
    %69 = vector.extract_strided_slice %35 {offsets = [2, 0, 0], sizes = [1, 8, 1], strides = [1, 1, 1]} : vector<9x8x1xf32> to vector<1x8x1xf32>
    %70 = vector.shape_cast %69 : vector<1x8x1xf32> to vector<8x1xf32>
    %71 = vector.broadcast %70 : vector<8x1xf32> to vector<8x256xf32>
    %72 = arith.mulf %59, %71 : vector<8x256xf32>
    %73 = arith.addf %68, %72 : vector<8x256xf32>
    %74 = vector.extract_strided_slice %35 {offsets = [3, 0, 0], sizes = [1, 8, 1], strides = [1, 1, 1]} : vector<9x8x1xf32> to vector<1x8x1xf32>
    %75 = vector.shape_cast %74 : vector<1x8x1xf32> to vector<8x1xf32>
    %76 = vector.broadcast %75 : vector<8x1xf32> to vector<8x256xf32>
    %77 = arith.mulf %56, %76 : vector<8x256xf32>
    %78 = vector.extract_strided_slice %35 {offsets = [4, 0, 0], sizes = [1, 8, 1], strides = [1, 1, 1]} : vector<9x8x1xf32> to vector<1x8x1xf32>
    %79 = vector.shape_cast %78 : vector<1x8x1xf32> to vector<8x1xf32>
    %80 = vector.broadcast %79 : vector<8x1xf32> to vector<8x256xf32>
    %81 = arith.mulf %53, %80 : vector<8x256xf32>
    %82 = arith.addf %77, %81 : vector<8x256xf32>
    %83 = vector.extract_strided_slice %35 {offsets = [5, 0, 0], sizes = [1, 8, 1], strides = [1, 1, 1]} : vector<9x8x1xf32> to vector<1x8x1xf32>
    %84 = vector.shape_cast %83 : vector<1x8x1xf32> to vector<8x1xf32>
    %85 = vector.broadcast %84 : vector<8x1xf32> to vector<8x256xf32>
    %86 = arith.mulf %59, %85 : vector<8x256xf32>
    %87 = arith.addf %82, %86 : vector<8x256xf32>
    %88 = vector.extract_strided_slice %35 {offsets = [6, 0, 0], sizes = [1, 8, 1], strides = [1, 1, 1]} : vector<9x8x1xf32> to vector<1x8x1xf32>
    %89 = vector.shape_cast %88 : vector<1x8x1xf32> to vector<8x1xf32>
    %90 = vector.broadcast %89 : vector<8x1xf32> to vector<8x256xf32>
    %91 = arith.mulf %56, %90 : vector<8x256xf32>
    %92 = vector.extract_strided_slice %35 {offsets = [7, 0, 0], sizes = [1, 8, 1], strides = [1, 1, 1]} : vector<9x8x1xf32> to vector<1x8x1xf32>
    %93 = vector.shape_cast %92 : vector<1x8x1xf32> to vector<8x1xf32>
    %94 = vector.broadcast %93 : vector<8x1xf32> to vector<8x256xf32>
    %95 = arith.mulf %53, %94 : vector<8x256xf32>
    %96 = arith.addf %91, %95 : vector<8x256xf32>
    %97 = vector.extract_strided_slice %35 {offsets = [8, 0, 0], sizes = [1, 8, 1], strides = [1, 1, 1]} : vector<9x8x1xf32> to vector<1x8x1xf32>
    %98 = vector.shape_cast %97 : vector<1x8x1xf32> to vector<8x1xf32>
    %99 = vector.broadcast %98 : vector<8x1xf32> to vector<8x256xf32>
    %100 = arith.mulf %59, %99 : vector<8x256xf32>
    %101 = arith.addf %96, %100 : vector<8x256xf32>
    %c16_i32_36 = arith.constant 16 : i32
    %102 = tpu.dynamic_rotate %73 by %c16_i32_36 dim 1 : vector<8x256xf32>, i32 -> vector<8x256xf32>
    %103 = vector.broadcast %28 : vector<1x256xf32> to vector<8x256xf32>
    %104 = arith.mulf %102, %103 : vector<8x256xf32>
    %105 = arith.addf %87, %104 : vector<8x256xf32>
    %c240_i32_37 = arith.constant 240 : i32
    %106 = tpu.dynamic_rotate %101 by %c240_i32_37 dim 1 : vector<8x256xf32>, i32 -> vector<8x256xf32>
    %107 = vector.broadcast %32 : vector<1x256xf32> to vector<8x256xf32>
    %108 = arith.mulf %106, %107 : vector<8x256xf32>
    %109 = arith.addf %105, %108 : vector<8x256xf32>
    %110 = vector.broadcast %36 : vector<8x1xf32> to vector<8x256xf32>
    %111 = arith.addf %109, %110 : vector<8x256xf32>
    %cst_38 = arith.constant 0.000000e+00 : f32
    %cst_39 = arith.constant 6.000000e+00 : f32
    %112 = vector.broadcast %cst_38 : f32 to vector<8x256xf32>
    %113 = arith.maximumf %112, %111 : vector<8x256xf32>
    %114 = vector.broadcast %cst_39 : f32 to vector<8x256xf32>
    %115 = arith.minimumf %114, %113 : vector<8x256xf32>
    %cst_40 = arith.constant dense<0.000000e+00> : vector<8xf32>
    %116 = vector.multi_reduction <add>, %53, %cst_40 [1] : vector<8x256xf32> to vector<8xf32>
    %117 = vector.shape_cast %116 : vector<8xf32> to vector<8x1xf32>
    %cst_41 = arith.constant 2.560000e+02 : f32
    %118 = vector.broadcast %cst_41 : f32 to vector<8x1xf32>
    %119 = arith.divf %117, %118 : vector<8x1xf32>
    %cst_42 = arith.constant dense<0.000000e+00> : vector<8xf32>
    %120 = vector.multi_reduction <add>, %115, %cst_42 [1] : vector<8x256xf32> to vector<8xf32>
    %121 = vector.shape_cast %120 : vector<8xf32> to vector<8x1xf32>
    %cst_43 = arith.constant 2.560000e+02 : f32
    %122 = vector.broadcast %cst_43 : f32 to vector<8x1xf32>
    %123 = arith.divf %121, %122 : vector<8x1xf32>
    %cst_44 = arith.constant dense<0.000000e+00> : vector<4x1xf32>
    %124 = tpu.matmul %37, %119, %cst_44 {dimension_numbers = #tpu.dot_dimension_numbers<[1], [0], [0], [1], [0, 0, 1, 1], [], []>} : vector<4x8xf32>, vector<8x1xf32>, vector<4x1xf32> -> vector<4x1xf32>
    %cst_45 = arith.constant dense<0.000000e+00> : vector<4x1xf32>
    %125 = tpu.matmul %38, %123, %cst_45 {dimension_numbers = #tpu.dot_dimension_numbers<[1], [0], [0], [1], [0, 0, 1, 1], [], []>} : vector<4x8xf32>, vector<8x1xf32>, vector<4x1xf32> -> vector<4x1xf32>
    %126 = arith.addf %124, %125 : vector<4x1xf32>
    %cst_46 = arith.constant 0.000000e+00 : f32
    %cst_47 = arith.constant 6.000000e+00 : f32
    %127 = vector.broadcast %cst_46 : f32 to vector<4x1xf32>
    %128 = arith.maximumf %127, %126 : vector<4x1xf32>
    %129 = vector.broadcast %cst_47 : f32 to vector<4x1xf32>
    %130 = arith.minimumf %129, %128 : vector<4x1xf32>
    %cst_48 = arith.constant dense<0.000000e+00> : vector<16x1xf32>
    %131 = tpu.matmul %39, %130, %cst_48 {dimension_numbers = #tpu.dot_dimension_numbers<[1], [0], [0], [1], [0, 0, 1, 1], [], []>} : vector<16x4xf32>, vector<4x1xf32>, vector<16x1xf32> -> vector<16x1xf32>
    %cst_49 = arith.constant 0.000000e+00 : f32
    %132 = vector.broadcast %cst_49 : f32 to vector<16x1xf32>
    %133 = arith.subf %132, %131 : vector<16x1xf32>
    %134 = math.exp %133 : vector<16x1xf32>
    %cst_50 = arith.constant 1.000000e+00 : f32
    %135 = vector.broadcast %cst_50 : f32 to vector<16x1xf32>
    %136 = arith.addf %135, %134 : vector<16x1xf32>
    %cst_51 = arith.constant 1.000000e+00 : f32
    %137 = vector.broadcast %cst_51 : f32 to vector<16x1xf32>
    %138 = arith.divf %137, %136 : vector<16x1xf32>
    %139 = vector.extract_strided_slice %138 {offsets = [0, 0], sizes = [8, 1], strides = [1, 1]} : vector<16x1xf32> to vector<8x1xf32>
    %140 = vector.broadcast %139 : vector<8x1xf32> to vector<8x256xf32>
    %141 = arith.mulf %53, %140 : vector<8x256xf32>
    %142 = vector.extract_strided_slice %138 {offsets = [8, 0], sizes = [8, 1], strides = [1, 1]} : vector<16x1xf32> to vector<8x1xf32>
    %143 = vector.broadcast %142 : vector<8x1xf32> to vector<8x256xf32>
    %144 = arith.mulf %115, %143 : vector<8x256xf32>
    %cst_52 = arith.constant dense<0.000000e+00> : vector<4x256xf32>
    %145 = tpu.matmul %40, %141, %cst_52 {dimension_numbers = #tpu.dot_dimension_numbers<[1], [0], [0], [1], [0, 0, 1, 1], [], []>} : vector<4x8xf32>, vector<8x256xf32>, vector<4x256xf32> -> vector<4x256xf32>
    %cst_53 = arith.constant dense<0.000000e+00> : vector<4x256xf32>
    %146 = tpu.matmul %41, %144, %cst_53 {dimension_numbers = #tpu.dot_dimension_numbers<[1], [0], [0], [1], [0, 0, 1, 1], [], []>} : vector<4x8xf32>, vector<8x256xf32>, vector<4x256xf32> -> vector<4x256xf32>
    %147 = arith.addf %145, %146 : vector<4x256xf32>
    %148 = vector.broadcast %42 : vector<4x1xf32> to vector<4x256xf32>
    %149 = arith.addf %147, %148 : vector<4x256xf32>
    %c1_i32_54 = arith.constant 1 : i32
    %150 = tpu.dynamic_rotate %149 by %c1_i32_54 dim 1 : vector<4x256xf32>, i32 -> vector<4x256xf32>
    %151 = vector.broadcast %20 : vector<1x256xf32> to vector<4x256xf32>
    %152 = arith.mulf %150, %151 : vector<4x256xf32>
    %c255_i32_55 = arith.constant 255 : i32
    %153 = tpu.dynamic_rotate %149 by %c255_i32_55 dim 1 : vector<4x256xf32>, i32 -> vector<4x256xf32>
    %154 = vector.broadcast %24 : vector<1x256xf32> to vector<4x256xf32>
    %155 = arith.mulf %153, %154 : vector<4x256xf32>
    %156 = vector.extract_strided_slice %43 {offsets = [0, 0, 0], sizes = [1, 4, 1], strides = [1, 1, 1]} : vector<9x4x1xf32> to vector<1x4x1xf32>
    %157 = vector.shape_cast %156 : vector<1x4x1xf32> to vector<4x1xf32>
    %158 = vector.broadcast %157 : vector<4x1xf32> to vector<4x256xf32>
    %159 = arith.mulf %152, %158 : vector<4x256xf32>
    %160 = vector.extract_strided_slice %43 {offsets = [1, 0, 0], sizes = [1, 4, 1], strides = [1, 1, 1]} : vector<9x4x1xf32> to vector<1x4x1xf32>
    %161 = vector.shape_cast %160 : vector<1x4x1xf32> to vector<4x1xf32>
    %162 = vector.broadcast %161 : vector<4x1xf32> to vector<4x256xf32>
    %163 = arith.mulf %149, %162 : vector<4x256xf32>
    %164 = arith.addf %159, %163 : vector<4x256xf32>
    %165 = vector.extract_strided_slice %43 {offsets = [2, 0, 0], sizes = [1, 4, 1], strides = [1, 1, 1]} : vector<9x4x1xf32> to vector<1x4x1xf32>
    %166 = vector.shape_cast %165 : vector<1x4x1xf32> to vector<4x1xf32>
    %167 = vector.broadcast %166 : vector<4x1xf32> to vector<4x256xf32>
    %168 = arith.mulf %155, %167 : vector<4x256xf32>
    %169 = arith.addf %164, %168 : vector<4x256xf32>
    %170 = vector.extract_strided_slice %43 {offsets = [3, 0, 0], sizes = [1, 4, 1], strides = [1, 1, 1]} : vector<9x4x1xf32> to vector<1x4x1xf32>
    %171 = vector.shape_cast %170 : vector<1x4x1xf32> to vector<4x1xf32>
    %172 = vector.broadcast %171 : vector<4x1xf32> to vector<4x256xf32>
    %173 = arith.mulf %152, %172 : vector<4x256xf32>
    %174 = vector.extract_strided_slice %43 {offsets = [4, 0, 0], sizes = [1, 4, 1], strides = [1, 1, 1]} : vector<9x4x1xf32> to vector<1x4x1xf32>
    %175 = vector.shape_cast %174 : vector<1x4x1xf32> to vector<4x1xf32>
    %176 = vector.broadcast %175 : vector<4x1xf32> to vector<4x256xf32>
    %177 = arith.mulf %149, %176 : vector<4x256xf32>
    %178 = arith.addf %173, %177 : vector<4x256xf32>
    %179 = vector.extract_strided_slice %43 {offsets = [5, 0, 0], sizes = [1, 4, 1], strides = [1, 1, 1]} : vector<9x4x1xf32> to vector<1x4x1xf32>
    %180 = vector.shape_cast %179 : vector<1x4x1xf32> to vector<4x1xf32>
    %181 = vector.broadcast %180 : vector<4x1xf32> to vector<4x256xf32>
    %182 = arith.mulf %155, %181 : vector<4x256xf32>
    %183 = arith.addf %178, %182 : vector<4x256xf32>
    %184 = vector.extract_strided_slice %43 {offsets = [6, 0, 0], sizes = [1, 4, 1], strides = [1, 1, 1]} : vector<9x4x1xf32> to vector<1x4x1xf32>
    %185 = vector.shape_cast %184 : vector<1x4x1xf32> to vector<4x1xf32>
    %186 = vector.broadcast %185 : vector<4x1xf32> to vector<4x256xf32>
    %187 = arith.mulf %152, %186 : vector<4x256xf32>
    %188 = vector.extract_strided_slice %43 {offsets = [7, 0, 0], sizes = [1, 4, 1], strides = [1, 1, 1]} : vector<9x4x1xf32> to vector<1x4x1xf32>
    %189 = vector.shape_cast %188 : vector<1x4x1xf32> to vector<4x1xf32>
    %190 = vector.broadcast %189 : vector<4x1xf32> to vector<4x256xf32>
    %191 = arith.mulf %149, %190 : vector<4x256xf32>
    %192 = arith.addf %187, %191 : vector<4x256xf32>
    %193 = vector.extract_strided_slice %43 {offsets = [8, 0, 0], sizes = [1, 4, 1], strides = [1, 1, 1]} : vector<9x4x1xf32> to vector<1x4x1xf32>
    %194 = vector.shape_cast %193 : vector<1x4x1xf32> to vector<4x1xf32>
    %195 = vector.broadcast %194 : vector<4x1xf32> to vector<4x256xf32>
    %196 = arith.mulf %155, %195 : vector<4x256xf32>
    %197 = arith.addf %192, %196 : vector<4x256xf32>
    %c16_i32_56 = arith.constant 16 : i32
    %198 = tpu.dynamic_rotate %169 by %c16_i32_56 dim 1 : vector<4x256xf32>, i32 -> vector<4x256xf32>
    %199 = vector.broadcast %28 : vector<1x256xf32> to vector<4x256xf32>
    %200 = arith.mulf %198, %199 : vector<4x256xf32>
    %201 = arith.addf %183, %200 : vector<4x256xf32>
    %c240_i32_57 = arith.constant 240 : i32
    %202 = tpu.dynamic_rotate %197 by %c240_i32_57 dim 1 : vector<4x256xf32>, i32 -> vector<4x256xf32>
    %203 = vector.broadcast %32 : vector<1x256xf32> to vector<4x256xf32>
    %204 = arith.mulf %202, %203 : vector<4x256xf32>
    %205 = arith.addf %201, %204 : vector<4x256xf32>
    %206 = vector.broadcast %44 : vector<4x1xf32> to vector<4x256xf32>
    %207 = arith.addf %205, %206 : vector<4x256xf32>
    %208 = vector.extract_strided_slice %46 {offsets = [0, 0], sizes = [4, 256], strides = [1, 1]} : vector<8x256xf32> to vector<4x256xf32>
    %209 = arith.addf %149, %208 : vector<4x256xf32>
    %c0_58 = arith.constant 0 : index
    %c0_59 = arith.constant 0 : index
    %c0_60 = arith.constant 0 : index
    %210 = vector.load %arg14[%c0_58, %c0_59, %c0_60] : memref<1x8x256xf32, #tpu.memory_space<vmem>>, vector<1x4x256xf32>
    %211 = vector.shape_cast %210 : vector<1x4x256xf32> to vector<4x256xf32>
    %212 = vector.shape_cast %209 : vector<4x256xf32> to vector<1x4x256xf32>
    tpu.vector_store %arg14[%c0_58, %c0_59, %c0_60], %212 {strides = array<i32>} : memref<1x8x256xf32, #tpu.memory_space<vmem>>, vector<1x4x256xf32>,
    %213 = vector.extract_strided_slice %46 {offsets = [4, 0], sizes = [4, 256], strides = [1, 1]} : vector<8x256xf32> to vector<4x256xf32>
    %214 = arith.addf %207, %213 : vector<4x256xf32>
    %c0_61 = arith.constant 0 : index
    %c4 = arith.constant 4 : index
    %c0_62 = arith.constant 0 : index
    %215 = vector.load %arg14[%c0_61, %c4, %c0_62] : memref<1x8x256xf32, #tpu.memory_space<vmem>>, vector<1x4x256xf32>
    %216 = vector.shape_cast %215 : vector<1x4x256xf32> to vector<4x256xf32>
    %217 = vector.shape_cast %214 : vector<4x256xf32> to vector<1x4x256xf32>
    tpu.vector_store %arg14[%c0_61, %c4, %c0_62], %217 {strides = array<i32>} : memref<1x8x256xf32, #tpu.memory_space<vmem>>, vector<1x4x256xf32>,
    return
  }
  func.func @transform_0(%arg0: i32) -> (i32, i32, i32) {
    %c0_i32 = arith.constant 0 : i32
    %c0_i32_0 = arith.constant 0 : i32
    %c0_i32_1 = arith.constant 0 : i32
    return %arg0, %c0_i32, %c0_i32_0 : i32, i32, i32
  }
  func.func @transform_1(%arg0: i32) -> (i32, i32) {
    %c0_i32 = arith.constant 0 : i32
    %c0_i32_0 = arith.constant 0 : i32
    %c0_i32_1 = arith.constant 0 : i32
    return %c0_i32, %c0_i32_0 : i32, i32
  }
  func.func @transform_2(%arg0: i32) -> (i32, i32) {
    %c0_i32 = arith.constant 0 : i32
    %c0_i32_0 = arith.constant 0 : i32
    %c0_i32_1 = arith.constant 0 : i32
    return %c0_i32, %c0_i32_0 : i32, i32
  }
  func.func @transform_3(%arg0: i32) -> (i32, i32, i32) {
    %c0_i32 = arith.constant 0 : i32
    %c0_i32_0 = arith.constant 0 : i32
    %c0_i32_1 = arith.constant 0 : i32
    %c0_i32_2 = arith.constant 0 : i32
    return %c0_i32, %c0_i32_0, %c0_i32_1 : i32, i32, i32
  }
  func.func @transform_4(%arg0: i32) -> (i32, i32) {
    %c0_i32 = arith.constant 0 : i32
    %c0_i32_0 = arith.constant 0 : i32
    %c0_i32_1 = arith.constant 0 : i32
    return %c0_i32, %c0_i32_0 : i32, i32
  }
  func.func @transform_5(%arg0: i32) -> (i32, i32) {
    %c0_i32 = arith.constant 0 : i32
    %c0_i32_0 = arith.constant 0 : i32
    %c0_i32_1 = arith.constant 0 : i32
    return %c0_i32, %c0_i32_0 : i32, i32
  }
  func.func @transform_6(%arg0: i32) -> (i32, i32) {
    %c0_i32 = arith.constant 0 : i32
    %c0_i32_0 = arith.constant 0 : i32
    %c0_i32_1 = arith.constant 0 : i32
    return %c0_i32, %c0_i32_0 : i32, i32
  }
  func.func @transform_7(%arg0: i32) -> (i32, i32) {
    %c0_i32 = arith.constant 0 : i32
    %c0_i32_0 = arith.constant 0 : i32
    %c0_i32_1 = arith.constant 0 : i32
    return %c0_i32, %c0_i32_0 : i32, i32
  }
  func.func @transform_8(%arg0: i32) -> (i32, i32) {
    %c0_i32 = arith.constant 0 : i32
    %c0_i32_0 = arith.constant 0 : i32
    %c0_i32_1 = arith.constant 0 : i32
    return %c0_i32, %c0_i32_0 : i32, i32
  }
  func.func @transform_9(%arg0: i32) -> (i32, i32) {
    %c0_i32 = arith.constant 0 : i32
    %c0_i32_0 = arith.constant 0 : i32
    %c0_i32_1 = arith.constant 0 : i32
    return %c0_i32, %c0_i32_0 : i32, i32
  }
  func.func @transform_10(%arg0: i32) -> (i32, i32) {
    %c0_i32 = arith.constant 0 : i32
    %c0_i32_0 = arith.constant 0 : i32
    %c0_i32_1 = arith.constant 0 : i32
    return %c0_i32, %c0_i32_0 : i32, i32
  }
  func.func @transform_11(%arg0: i32) -> (i32, i32, i32) {
    %c0_i32 = arith.constant 0 : i32
    %c0_i32_0 = arith.constant 0 : i32
    %c0_i32_1 = arith.constant 0 : i32
    %c0_i32_2 = arith.constant 0 : i32
    return %c0_i32, %c0_i32_0, %c0_i32_1 : i32, i32, i32
  }
  func.func @transform_12(%arg0: i32) -> (i32, i32) {
    %c0_i32 = arith.constant 0 : i32
    %c0_i32_0 = arith.constant 0 : i32
    %c0_i32_1 = arith.constant 0 : i32
    return %c0_i32, %c0_i32_0 : i32, i32
  }
  func.func @transform_13(%arg0: i32) -> (i32, i32, i32) {
    %c0_i32 = arith.constant 0 : i32
    %c0_i32_0 = arith.constant 0 : i32
    %c0_i32_1 = arith.constant 0 : i32
    return %arg0, %c0_i32, %c0_i32_0 : i32, i32, i32
  }
}

</mosaic_0001>

<llo_original>
// kernel: tpu_custom_call.1
$region0: #{tpu_custom_call.1}
  #allocation0 [shape = 'u32[]', space=smem, size = 0x4, offset = 0x4, fixed_abs, tag = 'smem constant byte address 0x4 - core index']
  #allocation1 [shape = 'u32[144,128]{1,0:T(1,128)}', space=vmem, size = 0x12000, scoped, tag = 'internal scratch']
  %s0 = inlined_call_operand.vmem [shape: f32[2,8,256], index: 0, kind: input, shape index: {}]
  %s1 = inlined_call_operand.vmem [shape: f32[8,8], index: 1, kind: input, shape index: {}]
  %s2 = inlined_call_operand.vmem [shape: f32[8,1], index: 2, kind: input, shape index: {}]
  %s3 = inlined_call_operand.vmem [shape: f32[9,8,1], index: 3, kind: input, shape index: {}]
  %s4 = inlined_call_operand.vmem [shape: f32[8,1], index: 4, kind: input, shape index: {}]
  %s5 = inlined_call_operand.vmem [shape: f32[4,8], index: 5, kind: input, shape index: {}]
  %s6 = inlined_call_operand.vmem [shape: f32[4,8], index: 6, kind: input, shape index: {}]
  %s7 = inlined_call_operand.vmem [shape: f32[16,4], index: 7, kind: input, shape index: {}]
  %s8 = inlined_call_operand.vmem [shape: f32[4,8], index: 8, kind: input, shape index: {}]
  %s9 = inlined_call_operand.vmem [shape: f32[4,8], index: 9, kind: input, shape index: {}]
  %s10 = inlined_call_operand.vmem [shape: f32[4,1], index: 10, kind: input, shape index: {}]
  %s11 = inlined_call_operand.vmem [shape: f32[9,4,1], index: 11, kind: input, shape index: {}]
  %s12 = inlined_call_operand.vmem [shape: f32[4,1], index: 12, kind: input, shape index: {}]
  %s13 = inlined_call_operand.hbm [shape: f32[2,8,256], index: 13, kind: output, shape index: {}]
  %s14 = sld [smem:[#allocation0]]
  $region85: #{tpu_custom_call.1} parent=0
    _
  %s16 = ssub.s32 1, %s14
  %s17 = scalar_select 0, %s16, %s14
  $region1: #{tpu_custom_call.1} parent=0
    #allocation2 [shape = 'u8[16384]{0}', space=vmem, size = 0x4000, scoped, tag = 'output window, operand 0']
    #allocation3 [shape = 's32[2]{0}', space=sflag, size = 0x8, scoped, tag = 'scoped memory for tpu_custom_call.1']
    %18 = vsyncpa [#allocation3], 0
    %s19 = scalar_lea.sflag [#allocation3], 1
    %20 = vsyncpa %s19, 0
    loop: start=0, step=1, limit=4
    $region2: #{tpu_custom_call.1} parent=1 // loop_pre_header
      _
    $region3: #{tpu_custom_call.1} parent=1 // loop_header
      %s22 = sphi 0, %s26
      %p23 = scmp.ge.s32.totalorder %s22, 4
      %s32 = sphi 0, %s34
      %s35 = sphi 0, %s32
      %s36 = sphi 0, %s35
      %s52 = sphi 0, %s36
      %s56 = sphi 0, %s56
      %s58 = sphi 0, %s56
      %s59 = sphi 0, %s58
      %s73 = sphi 0, %s59
      %s77 = sphi 0, %s77
      %s79 = sphi 0, %s77
      %s80 = sphi 0, %s79
      %s94 = sphi 0, %s80
      %s98 = sphi 0, %s98
      %s100 = sphi 0, %s98
      %s101 = sphi 0, %s100
      %s115 = sphi 0, %s101
      %s119 = sphi 0, %s119
      %s121 = sphi 0, %s119
      %s122 = sphi 0, %s121
      %s136 = sphi 0, %s122
      %s140 = sphi 0, %s140
      %s142 = sphi 0, %s140
      %s143 = sphi 0, %s142
      %s157 = sphi 0, %s143
      %s161 = sphi 0, %s161
      %s163 = sphi 0, %s161
      %s164 = sphi 0, %s163
      %s178 = sphi 0, %s164
      %s182 = sphi 0, %s182
      %s184 = sphi 0, %s182
      %s185 = sphi 0, %s184
      %s199 = sphi 0, %s185
      %s203 = sphi 0, %s203
      %s205 = sphi 0, %s203
      %s206 = sphi 0, %s205
      %s220 = sphi 0, %s206
      %s224 = sphi 0, %s224
      %s226 = sphi 0, %s224
      %s227 = sphi 0, %s226
      %s241 = sphi 0, %s227
      %s245 = sphi 0, %s245
      %s247 = sphi 0, %s245
      %s248 = sphi 0, %s247
      %s262 = sphi 0, %s248
      %s266 = sphi 0, %s266
      %s268 = sphi 0, %s266
      %s269 = sphi 0, %s268
      %s283 = sphi 0, %s269
      %s287 = sphi 0, %s287
      %s289 = sphi 0, %s287
      %s290 = sphi 0, %s289
      %s304 = sphi 0, %s290
      %s310 = sphi 0, %s312
      %s313 = sphi 0, %s310
      %s314 = sphi 0, %s313
      %s330 = sphi 0, %s314
    $region4: #{tpu_custom_call.1} parent=1 // loop_header_branch
      %25 = sbr.rel (%p23) target = $region8
    $region5: #{tpu_custom_call.1} parent=1 // loop_body
      %s27 = ssub.s32 %s22, 1
      %s28 = ssub.s32 %s22, 2
      %s29 = sadd.s32 %s22, 1
      %s30 = ssub.s32 %s22, %s29
      %p31 = scmp.eq.s32.totalorder %s30, 0
      %s33 = sadd.s32 %s32, 1
      %s34 = scalar_select %p31, %s32, %s33
      %p37 = pneg %p31
      %p38 = scmp.eq.s32.totalorder %s22, 1
      %p39 = por %p37, %p38
      %p40 = scmp.ne.s32.totalorder %s32, %s35
      %p41 = scmp.eq.s32.totalorder %s22, 0
      %p42 = por %p40, %p41
      %p43 = scmp.ne.s32.totalorder %s32, %s35
      %p44 = scmp.eq.s32.totalorder %s27, 1
      %p45 = por %p43, %p44
      %p46 = scmp.ne.s32.totalorder %s35, %s36
      %p47 = scmp.eq.s32.totalorder %s27, 0
      %p48 = por %p46, %p47
      %p49 = scmp.ne.s32.totalorder %s35, %s36
      %p50 = scmp.eq.s32.totalorder %s28, 1
      %p51 = por %p49, %p50
      %p53 = scmp.ne.s32.totalorder %s36, %s52
      %p54 = scmp.eq.s32.totalorder %s28, 0
      %p55 = por %p53, %p54
      %s57 = sadd.s32 %s56, 1
      %p60 = scmp.eq.s32.totalorder %s22, 1
      %p61 = scmp.ne.s32.totalorder %s56, %s58
      %p62 = scmp.eq.s32.totalorder %s22, 0
      %p63 = por %p61, %p62
      %p64 = scmp.ne.s32.totalorder %s56, %s58
      %p65 = scmp.eq.s32.totalorder %s27, 1
      %p66 = por %p64, %p65
      %p67 = scmp.ne.s32.totalorder %s58, %s59
      %p68 = scmp.eq.s32.totalorder %s27, 0
      %p69 = por %p67, %p68
      %p70 = scmp.ne.s32.totalorder %s58, %s59
      %p71 = scmp.eq.s32.totalorder %s28, 1
      %p72 = por %p70, %p71
      %p74 = scmp.ne.s32.totalorder %s59, %s73
      %p75 = scmp.eq.s32.totalorder %s28, 0
      %p76 = por %p74, %p75
      %s78 = sadd.s32 %s77, 1
      %p81 = scmp.eq.s32.totalorder %s22, 1
      %p82 = scmp.ne.s32.totalorder %s77, %s79
      %p83 = scmp.eq.s32.totalorder %s22, 0
      %p84 = por %p82, %p83
      %p85 = scmp.ne.s32.totalorder %s77, %s79
      %p86 = scmp.eq.s32.totalorder %s27, 1
      %p87 = por %p85, %p86
      %p88 = scmp.ne.s32.totalorder %s79, %s80
      %p89 = scmp.eq.s32.totalorder %s27, 0
      %p90 = por %p88, %p89
      %p91 = scmp.ne.s32.totalorder %s79, %s80
      %p92 = scmp.eq.s32.totalorder %s28, 1
      %p93 = por %p91, %p92
      %p95 = scmp.ne.s32.totalorder %s80, %s94
      %p96 = scmp.eq.s32.totalorder %s28, 0
      %p97 = por %p95, %p96
      %s99 = sadd.s32 %s98, 1
      %p102 = scmp.eq.s32.totalorder %s22, 1
      %p103 = scmp.ne.s32.totalorder %s98, %s100
      %p104 = scmp.eq.s32.totalorder %s22, 0
      %p105 = por %p103, %p104
      %p106 = scmp.ne.s32.totalorder %s98, %s100
      %p107 = scmp.eq.s32.totalorder %s27, 1
      %p108 = por %p106, %p107
      %p109 = scmp.ne.s32.totalorder %s100, %s101
      %p110 = scmp.eq.s32.totalorder %s27, 0
      %p111 = por %p109, %p110
      %p112 = scmp.ne.s32.totalorder %s100, %s101
      %p113 = scmp.eq.s32.totalorder %s28, 1
      %p114 = por %p112, %p113
      %p116 = scmp.ne.s32.totalorder %s101, %s115
      %p117 = scmp.eq.s32.totalorder %s28, 0
      %p118 = por %p116, %p117
      %s120 = sadd.s32 %s119, 1
      %p123 = scmp.eq.s32.totalorder %s22, 1
      %p124 = scmp.ne.s32.totalorder %s119, %s121
      %p125 = scmp.eq.s32.totalorder %s22, 0
      %p126 = por %p124, %p125
      %p127 = scmp.ne.s32.totalorder %s119, %s121
      %p128 = scmp.eq.s32.totalorder %s27, 1
      %p129 = por %p127, %p128
      %p130 = scmp.ne.s32.totalorder %s121, %s122
      %p131 = scmp.eq.s32.totalorder %s27, 0
      %p132 = por %p130, %p131
      %p133 = scmp.ne.s32.totalorder %s121, %s122
      %p134 = scmp.eq.s32.totalorder %s28, 1
      %p135 = por %p133, %p134
      %p137 = scmp.ne.s32.totalorder %s122, %s136
      %p138 = scmp.eq.s32.totalorder %s28, 0
      %p139 = por %p137, %p138
      %s141 = sadd.s32 %s140, 1
      %p144 = scmp.eq.s32.totalorder %s22, 1
      %p145 = scmp.ne.s32.totalorder %s140, %s142
      %p146 = scmp.eq.s32.totalorder %s22, 0
      %p147 = por %p145, %p146
      %p148 = scmp.ne.s32.totalorder %s140, %s142
      %p149 = scmp.eq.s32.totalorder %s27, 1
      %p150 = por %p148, %p149
      %p151 = scmp.ne.s32.totalorder %s142, %s143
      %p152 = scmp.eq.s32.totalorder %s27, 0
      %p153 = por %p151, %p152
      %p154 = scmp.ne.s32.totalorder %s142, %s143
      %p155 = scmp.eq.s32.totalorder %s28, 1
      %p156 = por %p154, %p155
      %p158 = scmp.ne.s32.totalorder %s143, %s157
      %p159 = scmp.eq.s32.totalorder %s28, 0
      %p160 = por %p158, %p159
      %s162 = sadd.s32 %s161, 1
      %p165 = scmp.eq.s32.totalorder %s22, 1
      %p166 = scmp.ne.s32.totalorder %s161, %s163
      %p167 = scmp.eq.s32.totalorder %s22, 0
      %p168 = por %p166, %p167
      %p169 = scmp.ne.s32.totalorder %s161, %s163
      %p170 = scmp.eq.s32.totalorder %s27, 1
      %p171 = por %p169, %p170
      %p172 = scmp.ne.s32.totalorder %s163, %s164
      %p173 = scmp.eq.s32.totalorder %s27, 0
      %p174 = por %p172, %p173
      %p175 = scmp.ne.s32.totalorder %s163, %s164
      %p176 = scmp.eq.s32.totalorder %s28, 1
      %p177 = por %p175, %p176
      %p179 = scmp.ne.s32.totalorder %s164, %s178
      %p180 = scmp.eq.s32.totalorder %s28, 0
      %p181 = por %p179, %p180
      %s183 = sadd.s32 %s182, 1
      %p186 = scmp.eq.s32.totalorder %s22, 1
      %p187 = scmp.ne.s32.totalorder %s182, %s184
      %p188 = scmp.eq.s32.totalorder %s22, 0
      %p189 = por %p187, %p188
      %p190 = scmp.ne.s32.totalorder %s182, %s184
      %p191 = scmp.eq.s32.totalorder %s27, 1
      %p192 = por %p190, %p191
      %p193 = scmp.ne.s32.totalorder %s184, %s185
      %p194 = scmp.eq.s32.totalorder %s27, 0
      %p195 = por %p193, %p194
      %p196 = scmp.ne.s32.totalorder %s184, %s185
      %p197 = scmp.eq.s32.totalorder %s28, 1
      %p198 = por %p196, %p197
      %p200 = scmp.ne.s32.totalorder %s185, %s199
      %p201 = scmp.eq.s32.totalorder %s28, 0
      %p202 = por %p200, %p201
      %s204 = sadd.s32 %s203, 1
      %p207 = scmp.eq.s32.totalorder %s22, 1
      %p208 = scmp.ne.s32.totalorder %s203, %s205
      %p209 = scmp.eq.s32.totalorder %s22, 0
      %p210 = por %p208, %p209
      %p211 = scmp.ne.s32.totalorder %s203, %s205
      %p212 = scmp.eq.s32.totalorder %s27, 1
      %p213 = por %p211, %p212
      %p214 = scmp.ne.s32.totalorder %s205, %s206
      %p215 = scmp.eq.s32.totalorder %s27, 0
      %p216 = por %p214, %p215
      %p217 = scmp.ne.s32.totalorder %s205, %s206
      %p218 = scmp.eq.s32.totalorder %s28, 1
      %p219 = por %p217, %p218
      %p221 = scmp.ne.s32.totalorder %s206, %s220
      %p222 = scmp.eq.s32.totalorder %s28, 0
      %p223 = por %p221, %p222
      %s225 = sadd.s32 %s224, 1
      %p228 = scmp.eq.s32.totalorder %s22, 1
      %p229 = scmp.ne.s32.totalorder %s224, %s226
      %p230 = scmp.eq.s32.totalorder %s22, 0
      %p231 = por %p229, %p230
      %p232 = scmp.ne.s32.totalorder %s224, %s226
      %p233 = scmp.eq.s32.totalorder %s27, 1
      %p234 = por %p232, %p233
      %p235 = scmp.ne.s32.totalorder %s226, %s227
      %p236 = scmp.eq.s32.totalorder %s27, 0
      %p237 = por %p235, %p236
      %p238 = scmp.ne.s32.totalorder %s226, %s227
      %p239 = scmp.eq.s32.totalorder %s28, 1
      %p240 = por %p238, %p239
      %p242 = scmp.ne.s32.totalorder %s227, %s241
      %p243 = scmp.eq.s32.totalorder %s28, 0
      %p244 = por %p242, %p243
      %s246 = sadd.s32 %s245, 1
      %p249 = scmp.eq.s32.totalorder %s22, 1
      %p250 = scmp.ne.s32.totalorder %s245, %s247
      %p251 = scmp.eq.s32.totalorder %s22, 0
      %p252 = por %p250, %p251
      %p253 = scmp.ne.s32.totalorder %s245, %s247
      %p254 = scmp.eq.s32.totalorder %s27, 1
      %p255 = por %p253, %p254
      %p256 = scmp.ne.s32.totalorder %s247, %s248
      %p257 = scmp.eq.s32.totalorder %s27, 0
      %p258 = por %p256, %p257
      %p259 = scmp.ne.s32.totalorder %s247, %s248
      %p260 = scmp.eq.s32.totalorder %s28, 1
      %p261 = por %p259, %p260
      %p263 = scmp.ne.s32.totalorder %s248, %s262
      %p264 = scmp.eq.s32.totalorder %s28, 0
      %p265 = por %p263, %p264
      %s267 = sadd.s32 %s266, 1
      %p270 = scmp.eq.s32.totalorder %s22, 1
      %p271 = scmp.ne.s32.totalorder %s266, %s268
      %p272 = scmp.eq.s32.totalorder %s22, 0
      %p273 = por %p271, %p272
      %p274 = scmp.ne.s32.totalorder %s266, %s268
      %p275 = scmp.eq.s32.totalorder %s27, 1
      %p276 = por %p274, %p275
      %p277 = scmp.ne.s32.totalorder %s268, %s269
      %p278 = scmp.eq.s32.totalorder %s27, 0
      %p279 = por %p277, %p278
      %p280 = scmp.ne.s32.totalorder %s268, %s269
      %p281 = scmp.eq.s32.totalorder %s28, 1
      %p282 = por %p280, %p281
      %p284 = scmp.ne.s32.totalorder %s269, %s283
      %p285 = scmp.eq.s32.totalorder %s28, 0
      %p286 = por %p284, %p285
      %s288 = sadd.s32 %s287, 1
      %p291 = scmp.eq.s32.totalorder %s22, 1
      %p292 = scmp.ne.s32.totalorder %s287, %s289
      %p293 = scmp.eq.s32.totalorder %s22, 0
      %p294 = por %p292, %p293
      %p295 = scmp.ne.s32.totalorder %s287, %s289
      %p296 = scmp.eq.s32.totalorder %s27, 1
      %p297 = por %p295, %p296
      %p298 = scmp.ne.s32.totalorder %s289, %s290
      %p299 = scmp.eq.s32.totalorder %s27, 0
      %p300 = por %p298, %p299
      %p301 = scmp.ne.s32.totalorder %s289, %s290
      %p302 = scmp.eq.s32.totalorder %s28, 1
      %p303 = por %p301, %p302
      %p305 = scmp.ne.s32.totalorder %s290, %s304
      %p306 = scmp.eq.s32.totalorder %s28, 0
      %p307 = por %p305, %p306
      %s308 = ssub.s32 %s22, %s29
      %p309 = scmp.eq.s32.totalorder %s308, 0
      %s311 = sadd.s32 %s310, 1
      %s312 = scalar_select %p309, %s310, %s311
      %p315 = pneg %p309
      %p316 = scmp.eq.s32.totalorder %s22, 1
      %p317 = por %p315, %p316
      %p318 = scmp.ne.s32.totalorder %s310, %s313
      %p319 = scmp.eq.s32.totalorder %s22, 0
      %p320 = por %p318, %p319
      %p321 = scmp.ne.s32.totalorder %s310, %s313
      %p322 = scmp.eq.s32.totalorder %s27, 1
      %p323 = por %p321, %p322
      %p324 = scmp.ne.s32.totalorder %s313, %s314
      %p325 = scmp.eq.s32.totalorder %s27, 0
      %p326 = por %p324, %p325
      %p327 = scmp.ne.s32.totalorder %s313, %s314
      %p328 = scmp.eq.s32.totalorder %s28, 1
      %p329 = por %p327, %p328
      %p331 = scmp.ne.s32.totalorder %s314, %s330
      %p332 = scmp.eq.s32.totalorder %s28, 0
      %p333 = por %p331, %p332
      %p334 = scmp.le.s32.totalorder 1, %s22
      %p335 = scmp.lt.s32.totalorder %s22, 3
      %p336 = pnand %p334, %p335
      %p337 = pneg %p336
      // Predicated region
      $region9: #{tpu_custom_call.1} parent=5 // pred_check
        _
      $region10: #{tpu_custom_call.1} parent=5 // pred_check_branch
        %339 = sbr.rel (%p336) target = $region12
      $region11: #{tpu_custom_call.1} parent=5 // pred_region
        %s340 = ssub.s32 %s22, 1
        // Predicated region
        $region13: #{tpu_custom_call.1} parent=11 // pred_check
          %p341 = pneg %p69
        $region14: #{tpu_custom_call.1} parent=11 // pred_check_branch
          %343 = sbr.rel (%p341) target = $region16
        $region15: #{tpu_custom_call.1} parent=11 // pred_region
          _
        $region16: #{tpu_custom_call.1} parent=11 // pred_fallthru
          _
        // Predicated region
        $region17: #{tpu_custom_call.1} parent=11 // pred_check
          %p344 = pneg %p90
        $region18: #{tpu_custom_call.1} parent=11 // pred_check_branch
          %346 = sbr.rel (%p344) target = $region20
        $region19: #{tpu_custom_call.1} parent=11 // pred_region
          _
        $region20: #{tpu_custom_call.1} parent=11 // pred_fallthru
          _
        // Predicated region
        $region21: #{tpu_custom_call.1} parent=11 // pred_check
          %p347 = pneg %p111
        $region22: #{tpu_custom_call.1} parent=11 // pred_check_branch
          %349 = sbr.rel (%p347) target = $region24
        $region23: #{tpu_custom_call.1} parent=11 // pred_region
          _
        $region24: #{tpu_custom_call.1} parent=11 // pred_fallthru
          _
        // Predicated region
        $region25: #{tpu_custom_call.1} parent=11 // pred_check
          %p350 = pneg %p132
        $region26: #{tpu_custom_call.1} parent=11 // pred_check_branch
          %352 = sbr.rel (%p350) target = $region28
        $region27: #{tpu_custom_call.1} parent=11 // pred_region
          _
        $region28: #{tpu_custom_call.1} parent=11 // pred_fallthru
          _
        // Predicated region
        $region29: #{tpu_custom_call.1} parent=11 // pred_check
          %p353 = pneg %p153
        $region30: #{tpu_custom_call.1} parent=11 // pred_check_branch
          %355 = sbr.rel (%p353) target = $region32
        $region31: #{tpu_custom_call.1} parent=11 // pred_region
          _
        $region32: #{tpu_custom_call.1} parent=11 // pred_fallthru
          _
        // Predicated region
        $region33: #{tpu_custom_call.1} parent=11 // pred_check
          %p356 = pneg %p174
        $region34: #{tpu_custom_call.1} parent=11 // pred_check_branch
          %358 = sbr.rel (%p356) target = $region36
        $region35: #{tpu_custom_call.1} parent=11 // pred_region
          _
        $region36: #{tpu_custom_call.1} parent=11 // pred_fallthru
          _
        // Predicated region
        $region37: #{tpu_custom_call.1} parent=11 // pred_check
          %p359 = pneg %p195
        $region38: #{tpu_custom_call.1} parent=11 // pred_check_branch
          %361 = sbr.rel (%p359) target = $region40
        $region39: #{tpu_custom_call.1} parent=11 // pred_region
          _
        $region40: #{tpu_custom_call.1} parent=11 // pred_fallthru
          _
        // Predicated region
        $region41: #{tpu_custom_call.1} parent=11 // pred_check
          %p362 = pneg %p216
        $region42: #{tpu_custom_call.1} parent=11 // pred_check_branch
          %364 = sbr.rel (%p362) target = $region44
        $region43: #{tpu_custom_call.1} parent=11 // pred_region
          _
        $region44: #{tpu_custom_call.1} parent=11 // pred_fallthru
          _
        // Predicated region
        $region45: #{tpu_custom_call.1} parent=11 // pred_check
          %p365 = pneg %p237
        $region46: #{tpu_custom_call.1} parent=11 // pred_check_branch
          %367 = sbr.rel (%p365) target = $region48
        $region47: #{tpu_custom_call.1} parent=11 // pred_region
          _
        $region48: #{tpu_custom_call.1} parent=11 // pred_fallthru
          _
        // Predicated region
        $region49: #{tpu_custom_call.1} parent=11 // pred_check
          %p368 = pneg %p258
        $region50: #{tpu_custom_call.1} parent=11 // pred_check_branch
          %370 = sbr.rel (%p368) target = $region52
        $region51: #{tpu_custom_call.1} parent=11 // pred_region
          _
        $region52: #{tpu_custom_call.1} parent=11 // pred_fallthru
          _
        // Predicated region
        $region53: #{tpu_custom_call.1} parent=11 // pred_check
          %p371 = pneg %p279
        $region54: #{tpu_custom_call.1} parent=11 // pred_check_branch
          %373 = sbr.rel (%p371) target = $region56
        $region55: #{tpu_custom_call.1} parent=11 // pred_region
          _
        $region56: #{tpu_custom_call.1} parent=11 // pred_fallthru
          _
        // Predicated region
        $region57: #{tpu_custom_call.1} parent=11 // pred_check
          %p374 = pneg %p300
        $region58: #{tpu_custom_call.1} parent=11 // pred_check_branch
          %376 = sbr.rel (%p374) target = $region60
        $region59: #{tpu_custom_call.1} parent=11 // pred_region
          _
        $region60: #{tpu_custom_call.1} parent=11 // pred_fallthru
          _
      $region12: #{tpu_custom_call.1} parent=5 // pred_fallthru
        _
      %p377 = scmp.lt.s32.totalorder %s22, 2
      // Predicated region
      $region61: #{tpu_custom_call.1} parent=5 // pred_check
        %p378 = pneg %p377
      $region62: #{tpu_custom_call.1} parent=5 // pred_check_branch
        %380 = sbr.rel (%p378) target = $region64
      $region63: #{tpu_custom_call.1} parent=5 // pred_region
        // Predicated region
        $region65: #{tpu_custom_call.1} parent=63 // pred_check
          %p381 = pneg %p42
        $region66: #{tpu_custom_call.1} parent=63 // pred_check_branch
          %383 = sbr.rel (%p381) target = $region68
        $region67: #{tpu_custom_call.1} parent=63 // pred_region
          %p384 = scmp.lt.s32.totalorder %s22, 1
          %s385 = scalar_select %p384, %s22, 1
          %s386 = smul.addr %s385, 2
          %s387 = smul.addr %s386, 8
          %s388 = scalar_lea.vmem %s0, %s387
        $region68: #{tpu_custom_call.1} parent=63 // pred_fallthru
          _
      $region64: #{tpu_custom_call.1} parent=5 // pred_fallthru
        _
      %p389 = scmp.le.s32.totalorder 1, %s22
      %p390 = scmp.lt.s32.totalorder %s22, 3
      %p391 = pnand %p389, %p390
      %p392 = pneg %p391
      // Predicated region
      $region69: #{tpu_custom_call.1} parent=5 // pred_check
        _
      $region70: #{tpu_custom_call.1} parent=5 // pred_check_branch
        %394 = sbr.rel (%p391) target = $region72
      $region71: #{tpu_custom_call.1} parent=5 // pred_region
        %s395 = ssub.s32 %s22, 1
        %p396 = scmp.lt.s32.totalorder %s27, 1
        %s397 = scalar_select %p396, %s27, 1
        %s398 = smul.addr %s397, 2
        %s399 = smul.addr %s398, 8
        %s400 = scalar_lea.vmem %s0, %s399
        %p401 = pneg %p48
        %p402 = pneg %p45
        %p403 = pneg %p69
        %p404 = pneg %p66
        %p405 = pneg %p90
        %p406 = pneg %p87
        %p407 = pneg %p111
        %p408 = pneg %p108
        %p409 = pneg %p132
        %p410 = pneg %p129
        %p411 = pneg %p153
        %p412 = pneg %p150
        %p413 = pneg %p174
        %p414 = pneg %p171
        %p415 = pneg %p195
        %p416 = pneg %p192
        %p417 = pneg %p216
        %p418 = pneg %p213
        %p419 = pneg %p237
        %p420 = pneg %p234
        %p421 = pneg %p258
        %p422 = pneg %p255
        %p423 = pneg %p279
        %p424 = pneg %p276
        %p425 = pneg %p300
        %p426 = pneg %p297
        %p427 = pneg %p326
        %p428 = pneg %p323
        %s429 = sand.u32 %s313, 1
        %s430 = scalar_lea.sflag [#allocation3], %s429
        %s431 = sand.u32 %s313, 1
        %s432 = smul.addr %s431, 16
        %s433 = scalar_lea.vmem [#allocation2], %s432
        %p434 = scmp.lt.s32.totalorder %s27, 1
        %s435 = scalar_select %p434, %s27, 1
        %s436 = smul.addr %s435, 2
        %s437 = smul.addr %s436, 8
        %s438 = scalar_lea.vmem %s0, %s437
        %v439 = vlaneseq
        %v440 = vand.u32 %v439, 127
        %v441 = vadd.s32 %v440, 128
        %vm442 = vcmp.lt.s32.totalorder %v440, 0
        %v443 = vsub.s32 0, %v440
        %v444 = vsel %vm442, %v443, %v440
        %v445 = vshrl.u32 %v444, 4
        %v446 = vand.u32 %v444, 15
        %v447 = vsub.s32 0, %v446
        %v448 = vsel %vm442, %v447, %v446
        %vm449 = vcmp.lt.s32.totalorder %v441, 0
        %v450 = vsub.s32 0, %v441
        %v451 = vsel %vm449, %v450, %v441
        %v452 = vshrl.u32 %v451, 4
        %v453 = vand.u32 %v451, 15
        %v454 = vsub.s32 0, %v453
        %v455 = vsel %vm449, %v454, %v453
        %vm456 = vcmp.ne.s32.totalorder %v448, 0
        %vm457 = vcmp.ne.s32.totalorder %v455, 0
        %vm458 = vcmp.lt.s32.totalorder %v448, 0
        %vm459 = vcmp.lt.s32.totalorder %v455, 0
        %vm460 = vmand %vm458, %vm456
        %vm461 = vmand %vm459, %vm457
        %v462 = vadd.s32 %v448, 16
        %v463 = vadd.s32 %v455, 16
        %v464 = vsel %vm460, %v462, %v448
        %v465 = vsel %vm461, %v463, %v455
        %vm466 = vcmp.ge.s32.totalorder %v464, 1
        %vm467 = vcmp.ge.s32.totalorder %v465, 1
        %v468 = vsel %vm466, 1, 0
        %v469 = vsel %vm467, 1, 0
        %v470 = vcvt.s32.f32 %v468
        %v471 = vcvt.s32.f32 %v469
        %vm472 = vcmp.le.s32.totalorder %v464, 14
        %vm473 = vcmp.le.s32.totalorder %v465, 14
        %v474 = vsel %vm472, 1, 0
        %v475 = vsel %vm473, 1, 0
        %v476 = vcvt.s32.f32 %v474
        %v477 = vcvt.s32.f32 %v475
        %vm478 = vcmp.ge.s32.totalorder %v440, 16
        %vm479 = vcmp.ge.s32.totalorder %v441, 16
        %v480 = vsel %vm478, 1, 0
        %v481 = vsel %vm479, 1, 0
        %v482 = vcvt.s32.f32 %v480
        %v483 = vcvt.s32.f32 %v481
        %vm484 = vcmp.lt.s32.totalorder %v440, 240
        %vm485 = vcmp.lt.s32.totalorder %v441, 240
        %v486 = vsel %vm484, 1, 0
        %v487 = vsel %vm485, 1, 0
        %v488 = vcvt.s32.f32 %v486
        %v489 = vcvt.s32.f32 %v487
        %v490 = vld [vmem:[%s1] sm:$0xff]
        %v491 = vld [vmem:[%s2] sm:$0xff]
        %v492 = vld [vmem:[%s3] sm:$0xff]
        %v493 = vld [vmem:[%s3 + $0x8] sm:$0xff]
        %v494 = vld [vmem:[%s3 + $0x10] sm:$0xff]
        %v495 = vld [vmem:[%s3 + $0x18] sm:$0xff]
        %v496 = vld [vmem:[%s3 + $0x20] sm:$0xff]
        %v497 = vld [vmem:[%s3 + $0x28] sm:$0xff]
        %v498 = vld [vmem:[%s3 + $0x30] sm:$0xff]
        %v499 = vld [vmem:[%s3 + $0x38] sm:$0xff]
        %v500 = vld [vmem:[%s3 + $0x40] sm:$0xff]
        %v501 = vld [vmem:[%s4] sm:$0xff]
        %v502 = vld [vmem:[%s5] sm:$0xf]
        %v503 = vld [vmem:[%s6] sm:$0xf]
        %v504 = vld [vmem:[%s7] sm:$0xff]
        %v505 = vld [vmem:[%s7 + $0x8] sm:$0xff]
        %v506 = vld [vmem:[%s8] sm:$0xf]
        %v507 = vld [vmem:[%s9] sm:$0xf]
        %v508 = vld [vmem:[%s10] sm:$0xf]
        %v509 = vld [vmem:[%s11] sm:$0xf]
        %v510 = vld [vmem:[%s11 + $0x4] sm:$0xf]
        %v511 = vld [vmem:[%s11 + $0x8] sm:$0xf]
        %v512 = vld [vmem:[%s11 + $0xc] sm:$0xf]
        %v513 = vld [vmem:[%s11 + $0x10] sm:$0xf]
        %v514 = vld [vmem:[%s11 + $0x14] sm:$0xf]
        %v515 = vld [vmem:[%s11 + $0x18] sm:$0xf]
        %v516 = vld [vmem:[%s11 + $0x1c] sm:$0xf]
        %v517 = vld [vmem:[%s11 + $0x20] sm:$0xf]
        %v518 = vld [vmem:[%s12] sm:$0xf]
        %v519 = vld [vmem:[%s438] sm:$0xff]
        %v520 = vld [vmem:[%s438 + $0x8] sm:$0xff]
        %522 = vset.pattern.permute.xlu0 0
        %523 = vperm.xlu0 %522, %v491
        %v524 = vpop.permute.xlu0 %523
        %vm526 = vcmask 64512
        %v528 = vsel %vm526, %v490, 0
        %530 = vmatprep.subr.mxu0 %v520
        %531 = vmatpush1.msra.mxu0 %v519
        %532 = vmatprep.subr.mxu0 0.0
        %533 = vmatpush1.msra.mxu0 0.0
        %534 = vmatprep.subr.mxu0 0.0
        %535 = vmatpush1.msra.mxu0 0.0
        %536 = vmatprep.subr.mxu0 0.0
        %537 = vmatpush1.msra.mxu0 0.0
        %538 = vmatprep.subr.mxu0 0.0
        %539 = vmatpush1.msra.mxu0 0.0
        %540 = vmatprep.subr.mxu0 0.0
        %541 = vmatpush1.msra.mxu0 0.0
        %542 = vmatprep.subr.mxu0 0.0
        %543 = vmatpush1.msra.mxu0 0.0
        %544 = vmatprep.subr.mxu0 0.0
        %545 = vmatpush1.msra.mxu0 0.0
        %546 = vmatprep.subr.mxu0 0.0
        %547 = vmatpush1.msra.mxu0 0.0
        %548 = vmatprep.subr.mxu0 0.0
        %549 = vmatpush1.msra.mxu0 0.0
        %550 = vmatprep.subr.mxu0 0.0
        %551 = vmatpush1.msra.mxu0 0.0
        %552 = vmatprep.subr.mxu0 0.0
        %553 = vmatpush1.msra.mxu0 0.0
        %554 = vmatprep.subr.mxu0 0.0
        %555 = vmatpush1.msra.mxu0 0.0
        %556 = vmatprep.subr.mxu0 0.0
        %557 = vmatpush1.msra.mxu0 0.0
        %558 = vmatprep.subr.mxu0 0.0
        %559 = vmatpush1.msra.mxu0 0.0
        %560 = vmatprep.subr.mxu0 0.0
        %561 = vmatpush1.msra.mxu0 0.0
        %562 = vmatprep.subr.mxu0 0.0
        %563 = vmatpush1.msra.mxu0 0.0
        %564 = vmatprep.subr.mxu0 0.0
        %565 = vmatpush1.msra.mxu0 0.0
        %566 = vmatprep.subr.mxu0 0.0
        %567 = vmatpush1.msra.mxu0 0.0
        %568 = vmatprep.subr.mxu0 0.0
        %569 = vmatpush1.msra.mxu0 0.0
        %570 = vmatprep.subr.mxu0 0.0
        %571 = vmatpush1.msra.mxu0 0.0
        %572 = vmatprep.subr.mxu0 0.0
        %573 = vmatpush1.msra.mxu0 0.0
        %574 = vmatprep.subr.mxu0 0.0
        %575 = vmatpush1.msra.mxu0 0.0
        %576 = vmatprep.subr.mxu0 0.0
        %577 = vmatpush1.msra.mxu0 0.0
        %578 = vmatprep.subr.mxu0 0.0
        %579 = vmatpush1.msra.mxu0 0.0
        %580 = vmatprep.subr.mxu0 0.0
        %581 = vmatpush1.msra.mxu0 0.0
        %582 = vmatprep.subr.mxu0 0.0
        %583 = vmatpush1.msra.mxu0 0.0
        %584 = vmatprep.subr.mxu0 0.0
        %585 = vmatpush1.msra.mxu0 0.0
        %586 = vmatprep.subr.mxu0 0.0
        %587 = vmatpush1.msra.mxu0 0.0
        %588 = vmatprep.subr.mxu0 0.0
        %589 = vmatpush1.msra.mxu0 0.0
        %590 = vmatprep.subr.mxu0 0.0
        %591 = vmatpush1.msra.mxu0 0.0
        %592 = vmatprep.subr.mxu0 0.0
        %593 = vmatpush1.msra.mxu0 0.0
        %594 = vmatprep.mubr.f32.mxu0 0.0
        %595 = vmatmul.mubr.f32.gmra.mrb[0].mxu0 %v528
        %v596 = vpop.f32.mrb[0].mxu0
        %v597 = vadd.f32 %v524, %v596
        %v598 = vpop.f32.mrb[0].mxu0
        %v599 = vadd.f32 %v524, %v598
        %600 = vdwg.mxu0
        %v601 = vmax.f32 %v597, 0.0
        %v602 = vmax.f32 %v599, 0.0
        %v603 = vmin.f32 %v601, 6.0
        %v604 = vmin.f32 %v602, 6.0
        %605 = vrot.lane.b32.xlu0 %v603, 1
        %v606 = vpop.permute.xlu0 %605
        %607 = vrot.lane.b32.xlu0 %v604, 1
        %v608 = vpop.permute.xlu0 %607
        %vm609 = vcmp.lt.s32.totalorder %v440, 1
        %v610 = vsel %vm609, %v606, %v608
        %v611 = vsel %vm609, %v608, %v606
        %v612 = vmul.f32 %v611, %v470
        %v613 = vmul.f32 %v610, %v471
        %614 = vrot.lane.b32.xlu0 %v603, 127
        %v615 = vpop.permute.xlu0 %614
        %616 = vrot.lane.b32.xlu0 %v604, 127
        %v617 = vpop.permute.xlu0 %616
        %vm618 = vcmp.lt.s32.totalorder %v440, 127
        %v619 = vsel %vm618, %v615, %v617
        %v620 = vsel %vm618, %v617, %v615
        %v621 = vmul.f32 %v619, %v476
        %v622 = vmul.f32 %v620, %v477
        %624 = vset.pattern.permute.xlu0 0
        %625 = vperm.xlu0 %624, %v492
        %v626 = vpop.permute.xlu0 %625
        %v628 = vmul.f32 %v612, %v626
        %v629 = vmul.f32 %v613, %v626
        %631 = vset.pattern.permute.xlu0 0
        %632 = vperm.xlu0 %631, %v493
        %v633 = vpop.permute.xlu0 %632
        %v635 = vmul.f32 %v603, %v633
        %v636 = vmul.f32 %v604, %v633
        %v637 = vadd.f32 %v628, %v635
        %v638 = vadd.f32 %v629, %v636
        %640 = vset.pattern.permute.xlu0 0
        %641 = vperm.xlu0 %640, %v494
        %v642 = vpop.permute.xlu0 %641
        %v644 = vmul.f32 %v621, %v642
        %v645 = vmul.f32 %v622, %v642
        %v646 = vadd.f32 %v637, %v644
        %v647 = vadd.f32 %v638, %v645
        %649 = vset.pattern.permute.xlu0 0
        %650 = vperm.xlu0 %649, %v495
        %v651 = vpop.permute.xlu0 %650
        %v653 = vmul.f32 %v612, %v651
        %v654 = vmul.f32 %v613, %v651
        %656 = vset.pattern.permute.xlu0 0
        %657 = vperm.xlu0 %656, %v496
        %v658 = vpop.permute.xlu0 %657
        %v660 = vmul.f32 %v603, %v658
        %v661 = vmul.f32 %v604, %v658
        %v662 = vadd.f32 %v653, %v660
        %v663 = vadd.f32 %v654, %v661
        %665 = vset.pattern.permute.xlu0 0
        %666 = vperm.xlu0 %665, %v497
        %v667 = vpop.permute.xlu0 %666
        %v669 = vmul.f32 %v621, %v667
        %v670 = vmul.f32 %v622, %v667
        %v671 = vadd.f32 %v662, %v669
        %v672 = vadd.f32 %v663, %v670
        %674 = vset.pattern.permute.xlu0 0
        %675 = vperm.xlu0 %674, %v498
        %v676 = vpop.permute.xlu0 %675
        %v678 = vmul.f32 %v612, %v676
        %v679 = vmul.f32 %v613, %v676
        %681 = vset.pattern.permute.xlu0 0
        %682 = vperm.xlu0 %681, %v499
        %v683 = vpop.permute.xlu0 %682
        %v685 = vmul.f32 %v603, %v683
        %v686 = vmul.f32 %v604, %v683
        %v687 = vadd.f32 %v678, %v685
        %v688 = vadd.f32 %v679, %v686
        %690 = vset.pattern.permute.xlu0 0
        %691 = vperm.xlu0 %690, %v500
        %v692 = vpop.permute.xlu0 %691
        %v694 = vmul.f32 %v621, %v692
        %v695 = vmul.f32 %v622, %v692
        %v696 = vadd.f32 %v687, %v694
        %v697 = vadd.f32 %v688, %v695
        %698 = vrot.lane.b32.xlu0 %v646, 16
        %v699 = vpop.permute.xlu0 %698
        %700 = vrot.lane.b32.xlu0 %v647, 16
        %v701 = vpop.permute.xlu0 %700
        %vm702 = vcmp.lt.s32.totalorder %v440, 16
        %v703 = vsel %vm702, %v699, %v701
        %v704 = vsel %vm702, %v701, %v699
        %v705 = vmul.f32 %v704, %v482
        %v706 = vmul.f32 %v703, %v483
        %v707 = vadd.f32 %v671, %v705
        %v708 = vadd.f32 %v672, %v706
        %709 = vrot.lane.b32.xlu0 %v696, 112
        %v710 = vpop.permute.xlu0 %709
        %711 = vrot.lane.b32.xlu0 %v697, 112
        %v712 = vpop.permute.xlu0 %711
        %vm713 = vcmp.lt.s32.totalorder %v440, 112
        %v714 = vsel %vm713, %v710, %v712
        %v715 = vsel %vm713, %v712, %v710
        %v716 = vmul.f32 %v714, %v488
        %v717 = vmul.f32 %v715, %v489
        %v718 = vadd.f32 %v707, %v716
        %v719 = vadd.f32 %v708, %v717
        %721 = vset.pattern.permute.xlu0 0
        %722 = vperm.xlu0 %721, %v501
        %v723 = vpop.permute.xlu0 %722
        %v725 = vadd.f32 %v718, %v723
        %v726 = vadd.f32 %v719, %v723
        %v727 = vmax.f32 %v725, 0.0
        %v728 = vmax.f32 %v726, 0.0
        %v729 = vmin.f32 %v727, 6.0
        %v730 = vmin.f32 %v728, 6.0
        %v731 = vadd.f32 %v603, %v604
        %732 = vadd.xlane.f32.xlu0 %v731
        %v733 = vpop.xlane.xlu0 %732
        %v734 = vrcp.pop 256.0
        %v735 = vmul.f32 %v733, %v734
        %v736 = vadd.f32 %v729, %v730
        %737 = vadd.xlane.f32.xlu0 %v736
        %v738 = vpop.xlane.xlu0 %737
        %v739 = vmul.f32 %v738, %v734
        %v741 = vsel %vm526, %v503, 0
        %743 = vmatprep.subr.mxu0 0.0
        %744 = vmatpush1.msra.mxu0 %v739
        %745 = vmatprep.subr.mxu0 0.0
        %746 = vmatpush1.msra.mxu0 0.0
        %747 = vmatprep.subr.mxu0 0.0
        %748 = vmatpush1.msra.mxu0 0.0
        %749 = vmatprep.subr.mxu0 0.0
        %750 = vmatpush1.msra.mxu0 0.0
        %751 = vmatprep.subr.mxu0 0.0
        %752 = vmatpush1.msra.mxu0 0.0
        %753 = vmatprep.subr.mxu0 0.0
        %754 = vmatpush1.msra.mxu0 0.0
        %755 = vmatprep.subr.mxu0 0.0
        %756 = vmatpush1.msra.mxu0 0.0
        %757 = vmatprep.subr.mxu0 0.0
        %758 = vmatpush1.msra.mxu0 0.0
        %759 = vmatprep.subr.mxu0 0.0
        %760 = vmatpush1.msra.mxu0 0.0
        %761 = vmatprep.subr.mxu0 0.0
        %762 = vmatpush1.msra.mxu0 0.0
        %763 = vmatprep.subr.mxu0 0.0
        %764 = vmatpush1.msra.mxu0 0.0
        %765 = vmatprep.subr.mxu0 0.0
        %766 = vmatpush1.msra.mxu0 0.0
        %767 = vmatprep.subr.mxu0 0.0
        %768 = vmatpush1.msra.mxu0 0.0
        %769 = vmatprep.subr.mxu0 0.0
        %770 = vmatpush1.msra.mxu0 0.0
        %771 = vmatprep.subr.mxu0 0.0
        %772 = vmatpush1.msra.mxu0 0.0
        %773 = vmatprep.subr.mxu0 0.0
        %774 = vmatpush1.msra.mxu0 0.0
        %775 = vmatprep.subr.mxu0 0.0
        %776 = vmatpush1.msra.mxu0 0.0
        %777 = vmatprep.subr.mxu0 0.0
        %778 = vmatpush1.msra.mxu0 0.0
        %779 = vmatprep.subr.mxu0 0.0
        %780 = vmatpush1.msra.mxu0 0.0
        %781 = vmatprep.subr.mxu0 0.0
        %782 = vmatpush1.msra.mxu0 0.0
        %783 = vmatprep.subr.mxu0 0.0
        %784 = vmatpush1.msra.mxu0 0.0
        %785 = vmatprep.subr.mxu0 0.0
        %786 = vmatpush1.msra.mxu0 0.0
        %787 = vmatprep.subr.mxu0 0.0
        %788 = vmatpush1.msra.mxu0 0.0
        %789 = vmatprep.subr.mxu0 0.0
        %790 = vmatpush1.msra.mxu0 0.0
        %791 = vmatprep.subr.mxu0 0.0
        %792 = vmatpush1.msra.mxu0 0.0
        %793 = vmatprep.subr.mxu0 0.0
        %794 = vmatpush1.msra.mxu0 0.0
        %795 = vmatprep.subr.mxu0 0.0
        %796 = vmatpush1.msra.mxu0 0.0
        %797 = vmatprep.subr.mxu0 0.0
        %798 = vmatpush1.msra.mxu0 0.0
        %799 = vmatprep.subr.mxu0 0.0
        %800 = vmatpush1.msra.mxu0 0.0
        %801 = vmatprep.subr.mxu0 0.0
        %802 = vmatpush1.msra.mxu0 0.0
        %803 = vmatprep.subr.mxu0 0.0
        %804 = vmatpush1.msra.mxu0 0.0
        %805 = vmatprep.subr.mxu0 0.0
        %806 = vmatpush1.msra.mxu0 0.0
        %807 = vmatprep.mubr.f32.mxu0 0.0
        %808 = vmatmul.mubr.f32.gmra.mrb[0].mxu0 %v741
        %v809 = vpop.f32.mrb[0].mxu0
        %v810 = vadd.f32 0.0, %v809
        %v811 = vpop.f32.mrb[0].mxu0
        %812 = vdwg.mxu0
        %v814 = vsel %vm526, %v502, 0
        %816 = vmatprep.subr.mxu0 0.0
        %817 = vmatpush1.msra.mxu0 %v735
        %818 = vmatprep.subr.mxu0 0.0
        %819 = vmatpush1.msra.mxu0 0.0
        %820 = vmatprep.subr.mxu0 0.0
        %821 = vmatpush1.msra.mxu0 0.0
        %822 = vmatprep.subr.mxu0 0.0
        %823 = vmatpush1.msra.mxu0 0.0
        %824 = vmatprep.subr.mxu0 0.0
        %825 = vmatpush1.msra.mxu0 0.0
        %826 = vmatprep.subr.mxu0 0.0
        %827 = vmatpush1.msra.mxu0 0.0
        %828 = vmatprep.subr.mxu0 0.0
        %829 = vmatpush1.msra.mxu0 0.0
        %830 = vmatprep.subr.mxu0 0.0
        %831 = vmatpush1.msra.mxu0 0.0
        %832 = vmatprep.subr.mxu0 0.0
        %833 = vmatpush1.msra.mxu0 0.0
        %834 = vmatprep.subr.mxu0 0.0
        %835 = vmatpush1.msra.mxu0 0.0
        %836 = vmatprep.subr.mxu0 0.0
        %837 = vmatpush1.msra.mxu0 0.0
        %838 = vmatprep.subr.mxu0 0.0
        %839 = vmatpush1.msra.mxu0 0.0
        %840 = vmatprep.subr.mxu0 0.0
        %841 = vmatpush1.msra.mxu0 0.0
        %842 = vmatprep.subr.mxu0 0.0
        %843 = vmatpush1.msra.mxu0 0.0
        %844 = vmatprep.subr.mxu0 0.0
        %845 = vmatpush1.msra.mxu0 0.0
        %846 = vmatprep.subr.mxu0 0.0
        %847 = vmatpush1.msra.mxu0 0.0
        %848 = vmatprep.subr.mxu0 0.0
        %849 = vmatpush1.msra.mxu0 0.0
        %850 = vmatprep.subr.mxu0 0.0
        %851 = vmatpush1.msra.mxu0 0.0
        %852 = vmatprep.subr.mxu0 0.0
        %853 = vmatpush1.msra.mxu0 0.0
        %854 = vmatprep.subr.mxu0 0.0
        %855 = vmatpush1.msra.mxu0 0.0
        %856 = vmatprep.subr.mxu0 0.0
        %857 = vmatpush1.msra.mxu0 0.0
        %858 = vmatprep.subr.mxu0 0.0
        %859 = vmatpush1.msra.mxu0 0.0
        %860 = vmatprep.subr.mxu0 0.0
        %861 = vmatpush1.msra.mxu0 0.0
        %862 = vmatprep.subr.mxu0 0.0
        %863 = vmatpush1.msra.mxu0 0.0
        %864 = vmatprep.subr.mxu0 0.0
        %865 = vmatpush1.msra.mxu0 0.0
        %866 = vmatprep.subr.mxu0 0.0
        %867 = vmatpush1.msra.mxu0 0.0
        %868 = vmatprep.subr.mxu0 0.0
        %869 = vmatpush1.msra.mxu0 0.0
        %870 = vmatprep.subr.mxu0 0.0
        %871 = vmatpush1.msra.mxu0 0.0
        %872 = vmatprep.subr.mxu0 0.0
        %873 = vmatpush1.msra.mxu0 0.0
        %874 = vmatprep.subr.mxu0 0.0
        %875 = vmatpush1.msra.mxu0 0.0
        %876 = vmatprep.subr.mxu0 0.0
        %877 = vmatpush1.msra.mxu0 0.0
        %878 = vmatprep.subr.mxu0 0.0
        %879 = vmatpush1.msra.mxu0 0.0
        %880 = vmatprep.mubr.f32.mxu0 0.0
        %881 = vmatmul.mubr.f32.gmra.mrb[0].mxu0 %v814
        %v882 = vpop.f32.mrb[0].mxu0
        %v883 = vadd.f32 %v810, %v882
        %v884 = vpop.f32.mrb[0].mxu0
        %885 = vdwg.mxu0
        %v886 = vmax.f32 %v883, 0.0
        %v887 = vmin.f32 %v886, 6.0
        %vm888 = vcmask 31744
        %v890 = vsel %vm888, %v504, 0
        %v893 = vsel %vm888, %v505, 0
        %vm895 = vcmask 1043456
        %v897 = vsel %vm895, %v887, 0
        %899 = vmatprep.subr.mxu0 0.0
        %900 = vmatpush1.msra.mxu0 %v897
        %901 = vmatprep.subr.mxu0 0.0
        %902 = vmatpush1.msra.mxu0 0.0
        %903 = vmatprep.subr.mxu0 0.0
        %904 = vmatpush1.msra.mxu0 0.0
        %905 = vmatprep.subr.mxu0 0.0
        %906 = vmatpush1.msra.mxu0 0.0
        %907 = vmatprep.subr.mxu0 0.0
        %908 = vmatpush1.msra.mxu0 0.0
        %909 = vmatprep.subr.mxu0 0.0
        %910 = vmatpush1.msra.mxu0 0.0
        %911 = vmatprep.subr.mxu0 0.0
        %912 = vmatpush1.msra.mxu0 0.0
        %913 = vmatprep.subr.mxu0 0.0
        %914 = vmatpush1.msra.mxu0 0.0
        %915 = vmatprep.subr.mxu0 0.0
        %916 = vmatpush1.msra.mxu0 0.0
        %917 = vmatprep.subr.mxu0 0.0
        %918 = vmatpush1.msra.mxu0 0.0
        %919 = vmatprep.subr.mxu0 0.0
        %920 = vmatpush1.msra.mxu0 0.0
        %921 = vmatprep.subr.mxu0 0.0
        %922 = vmatpush1.msra.mxu0 0.0
        %923 = vmatprep.subr.mxu0 0.0
        %924 = vmatpush1.msra.mxu0 0.0
        %925 = vmatprep.subr.mxu0 0.0
        %926 = vmatpush1.msra.mxu0 0.0
        %927 = vmatprep.subr.mxu0 0.0
        %928 = vmatpush1.msra.mxu0 0.0
        %929 = vmatprep.subr.mxu0 0.0
        %930 = vmatpush1.msra.mxu0 0.0
        %931 = vmatprep.subr.mxu0 0.0
        %932 = vmatpush1.msra.mxu0 0.0
        %933 = vmatprep.subr.mxu0 0.0
        %934 = vmatpush1.msra.mxu0 0.0
        %935 = vmatprep.subr.mxu0 0.0
        %936 = vmatpush1.msra.mxu0 0.0
        %937 = vmatprep.subr.mxu0 0.0
        %938 = vmatpush1.msra.mxu0 0.0
        %939 = vmatprep.subr.mxu0 0.0
        %940 = vmatpush1.msra.mxu0 0.0
        %941 = vmatprep.subr.mxu0 0.0
        %942 = vmatpush1.msra.mxu0 0.0
        %943 = vmatprep.subr.mxu0 0.0
        %944 = vmatpush1.msra.mxu0 0.0
        %945 = vmatprep.subr.mxu0 0.0
        %946 = vmatpush1.msra.mxu0 0.0
        %947 = vmatprep.subr.mxu0 0.0
        %948 = vmatpush1.msra.mxu0 0.0
        %949 = vmatprep.subr.mxu0 0.0
        %950 = vmatpush1.msra.mxu0 0.0
        %951 = vmatprep.subr.mxu0 0.0
        %952 = vmatpush1.msra.mxu0 0.0
        %953 = vmatprep.subr.mxu0 0.0
        %954 = vmatpush1.msra.mxu0 0.0
        %955 = vmatprep.subr.mxu0 0.0
        %956 = vmatpush1.msra.mxu0 0.0
        %957 = vmatprep.subr.mxu0 0.0
        %958 = vmatpush1.msra.mxu0 0.0
        %959 = vmatprep.subr.mxu0 0.0
        %960 = vmatpush1.msra.mxu0 0.0
        %961 = vmatprep.subr.mxu0 0.0
        %962 = vmatpush1.msra.mxu0 0.0
        %963 = vmatprep.mubr.f32.mxu0 0.0
        %964 = vmatmul.mubr.f32.gmra.mrb[0].mxu0 %v890
        %v965 = vpop.f32.mrb[0].mxu0
        %v966 = vadd.f32 0.0, %v965
        %v967 = vpop.f32.mrb[0].mxu0
        %968 = vmatprep.mubr.f32.mxu0 0.0
        %969 = vmatmul.mubr.f32.gmra.mrb[0].mxu0 %v893
        %v970 = vpop.f32.mrb[0].mxu0
        %v971 = vadd.f32 0.0, %v970
        %v972 = vpop.f32.mrb[0].mxu0
        %973 = vdwg.mxu0
        %v974 = vsub.f32 0.0, %v966
        %v975 = vsub.f32 0.0, %v971
        %v976 = vmul.f32 %v974, 1.442695
        %v977 = vpow.pop %v976
        %v978 = vmul.f32 %v975, 1.442695
        %v979 = vpow.pop %v978
        %v980 = vadd.f32 %v977, 1.0
        %v981 = vadd.f32 %v979, 1.0
        %v982 = vrcp.pop %v980
        %v983 = vmul.f32 1.0, %v982
        %v984 = vrcp.pop %v981
        %v985 = vmul.f32 1.0, %v984
        %987 = vset.pattern.permute.xlu0 0
        %988 = vperm.xlu0 %987, %v983
        %v989 = vpop.permute.xlu0 %988
        %v991 = vmul.f32 %v603, %v989
        %v992 = vmul.f32 %v604, %v989
        %994 = vset.pattern.permute.xlu0 0
        %995 = vperm.xlu0 %994, %v985
        %v996 = vpop.permute.xlu0 %995
        %v998 = vmul.f32 %v729, %v996
        %v999 = vmul.f32 %v730, %v996
        %v1001 = vsel %vm526, %v507, 0
        %1003 = vmatprep.subr.mxu0 %v999
        %1004 = vmatpush1.msra.mxu0 %v998
        %1005 = vmatprep.subr.mxu0 0.0
        %1006 = vmatpush1.msra.mxu0 0.0
        %1007 = vmatprep.subr.mxu0 0.0
        %1008 = vmatpush1.msra.mxu0 0.0
        %1009 = vmatprep.subr.mxu0 0.0
        %1010 = vmatpush1.msra.mxu0 0.0
        %1011 = vmatprep.subr.mxu0 0.0
        %1012 = vmatpush1.msra.mxu0 0.0
        %1013 = vmatprep.subr.mxu0 0.0
        %1014 = vmatpush1.msra.mxu0 0.0
        %1015 = vmatprep.subr.mxu0 0.0
        %1016 = vmatpush1.msra.mxu0 0.0
        %1017 = vmatprep.subr.mxu0 0.0
        %1018 = vmatpush1.msra.mxu0 0.0
        %1019 = vmatprep.subr.mxu0 0.0
        %1020 = vmatpush1.msra.mxu0 0.0
        %1021 = vmatprep.subr.mxu0 0.0
        %1022 = vmatpush1.msra.mxu0 0.0
        %1023 = vmatprep.subr.mxu0 0.0
        %1024 = vmatpush1.msra.mxu0 0.0
        %1025 = vmatprep.subr.mxu0 0.0
        %1026 = vmatpush1.msra.mxu0 0.0
        %1027 = vmatprep.subr.mxu0 0.0
        %1028 = vmatpush1.msra.mxu0 0.0
        %1029 = vmatprep.subr.mxu0 0.0
        %1030 = vmatpush1.msra.mxu0 0.0
        %1031 = vmatprep.subr.mxu0 0.0
        %1032 = vmatpush1.msra.mxu0 0.0
        %1033 = vmatprep.subr.mxu0 0.0
        %1034 = vmatpush1.msra.mxu0 0.0
        %1035 = vmatprep.subr.mxu0 0.0
        %1036 = vmatpush1.msra.mxu0 0.0
        %1037 = vmatprep.subr.mxu0 0.0
        %1038 = vmatpush1.msra.mxu0 0.0
        %1039 = vmatprep.subr.mxu0 0.0
        %1040 = vmatpush1.msra.mxu0 0.0
        %1041 = vmatprep.subr.mxu0 0.0
        %1042 = vmatpush1.msra.mxu0 0.0
        %1043 = vmatprep.subr.mxu0 0.0
        %1044 = vmatpush1.msra.mxu0 0.0
        %1045 = vmatprep.subr.mxu0 0.0
        %1046 = vmatpush1.msra.mxu0 0.0
        %1047 = vmatprep.subr.mxu0 0.0
        %1048 = vmatpush1.msra.mxu0 0.0
        %1049 = vmatprep.subr.mxu0 0.0
        %1050 = vmatpush1.msra.mxu0 0.0
        %1051 = vmatprep.subr.mxu0 0.0
        %1052 = vmatpush1.msra.mxu0 0.0
        %1053 = vmatprep.subr.mxu0 0.0
        %1054 = vmatpush1.msra.mxu0 0.0
        %1055 = vmatprep.subr.mxu0 0.0
        %1056 = vmatpush1.msra.mxu0 0.0
        %1057 = vmatprep.subr.mxu0 0.0
        %1058 = vmatpush1.msra.mxu0 0.0
        %1059 = vmatprep.subr.mxu0 0.0
        %1060 = vmatpush1.msra.mxu0 0.0
        %1061 = vmatprep.subr.mxu0 0.0
        %1062 = vmatpush1.msra.mxu0 0.0
        %1063 = vmatprep.subr.mxu0 0.0
        %1064 = vmatpush1.msra.mxu0 0.0
        %1065 = vmatprep.subr.mxu0 0.0
        %1066 = vmatpush1.msra.mxu0 0.0
        %1067 = vmatprep.mubr.f32.mxu0 0.0
        %1068 = vmatmul.mubr.f32.gmra.mrb[0].mxu0 %v1001
        %v1069 = vpop.f32.mrb[0].mxu0
        %v1070 = vadd.f32 0.0, %v1069
        %v1071 = vpop.f32.mrb[0].mxu0
        %v1072 = vadd.f32 0.0, %v1071
        %1073 = vdwg.mxu0
        %v1075 = vsel %vm526, %v506, 0
        %1077 = vmatprep.subr.mxu0 %v992
        %1078 = vmatpush1.msra.mxu0 %v991
        %1079 = vmatprep.subr.mxu0 0.0
        %1080 = vmatpush1.msra.mxu0 0.0
        %1081 = vmatprep.subr.mxu0 0.0
        %1082 = vmatpush1.msra.mxu0 0.0
        %1083 = vmatprep.subr.mxu0 0.0
        %1084 = vmatpush1.msra.mxu0 0.0
        %1085 = vmatprep.subr.mxu0 0.0
        %1086 = vmatpush1.msra.mxu0 0.0
        %1087 = vmatprep.subr.mxu0 0.0
        %1088 = vmatpush1.msra.mxu0 0.0
        %1089 = vmatprep.subr.mxu0 0.0
        %1090 = vmatpush1.msra.mxu0 0.0
        %1091 = vmatprep.subr.mxu0 0.0
        %1092 = vmatpush1.msra.mxu0 0.0
        %1093 = vmatprep.subr.mxu0 0.0
        %1094 = vmatpush1.msra.mxu0 0.0
        %1095 = vmatprep.subr.mxu0 0.0
        %1096 = vmatpush1.msra.mxu0 0.0
        %1097 = vmatprep.subr.mxu0 0.0
        %1098 = vmatpush1.msra.mxu0 0.0
        %1099 = vmatprep.subr.mxu0 0.0
        %1100 = vmatpush1.msra.mxu0 0.0
        %1101 = vmatprep.subr.mxu0 0.0
        %1102 = vmatpush1.msra.mxu0 0.0
        %1103 = vmatprep.subr.mxu0 0.0
        %1104 = vmatpush1.msra.mxu0 0.0
        %1105 = vmatprep.subr.mxu0 0.0
        %1106 = vmatpush1.msra.mxu0 0.0
        %1107 = vmatprep.subr.mxu0 0.0
        %1108 = vmatpush1.msra.mxu0 0.0
        %1109 = vmatprep.subr.mxu0 0.0
        %1110 = vmatpush1.msra.mxu0 0.0
        %1111 = vmatprep.subr.mxu0 0.0
        %1112 = vmatpush1.msra.mxu0 0.0
        %1113 = vmatprep.subr.mxu0 0.0
        %1114 = vmatpush1.msra.mxu0 0.0
        %1115 = vmatprep.subr.mxu0 0.0
        %1116 = vmatpush1.msra.mxu0 0.0
        %1117 = vmatprep.subr.mxu0 0.0
        %1118 = vmatpush1.msra.mxu0 0.0
        %1119 = vmatprep.subr.mxu0 0.0
        %1120 = vmatpush1.msra.mxu0 0.0
        %1121 = vmatprep.subr.mxu0 0.0
        %1122 = vmatpush1.msra.mxu0 0.0
        %1123 = vmatprep.subr.mxu0 0.0
        %1124 = vmatpush1.msra.mxu0 0.0
        %1125 = vmatprep.subr.mxu0 0.0
        %1126 = vmatpush1.msra.mxu0 0.0
        %1127 = vmatprep.subr.mxu0 0.0
        %1128 = vmatpush1.msra.mxu0 0.0
        %1129 = vmatprep.subr.mxu0 0.0
        %1130 = vmatpush1.msra.mxu0 0.0
        %1131 = vmatprep.subr.mxu0 0.0
        %1132 = vmatpush1.msra.mxu0 0.0
        %1133 = vmatprep.subr.mxu0 0.0
        %1134 = vmatpush1.msra.mxu0 0.0
        %1135 = vmatprep.subr.mxu0 0.0
        %1136 = vmatpush1.msra.mxu0 0.0
        %1137 = vmatprep.subr.mxu0 0.0
        %1138 = vmatpush1.msra.mxu0 0.0
        %1139 = vmatprep.subr.mxu0 0.0
        %1140 = vmatpush1.msra.mxu0 0.0
        %1141 = vmatprep.mubr.f32.mxu0 0.0
        %1142 = vmatmul.mubr.f32.gmra.mrb[0].mxu0 %v1075
        %v1143 = vpop.f32.mrb[0].mxu0
        %v1144 = vadd.f32 %v1070, %v1143
        %v1145 = vpop.f32.mrb[0].mxu0
        %v1146 = vadd.f32 %v1072, %v1145
        %1147 = vdwg.mxu0
        %1149 = vset.pattern.permute.xlu0 0
        %1150 = vperm.xlu0 %1149, %v508
        %v1151 = vpop.permute.xlu0 %1150
        %v1153 = vadd.f32 %v1144, %v1151
        %v1154 = vadd.f32 %v1146, %v1151
        %1155 = vrot.lane.b32.xlu0 %v1153, 1
        %v1156 = vpop.permute.xlu0 %1155
        %1157 = vrot.lane.b32.xlu0 %v1154, 1
        %v1158 = vpop.permute.xlu0 %1157
        %v1159 = vsel %vm609, %v1156, %v1158
        %v1160 = vsel %vm609, %v1158, %v1156
        %v1161 = vmul.f32 %v1160, %v470
        %v1162 = vmul.f32 %v1159, %v471
        %1163 = vrot.lane.b32.xlu0 %v1153, 127
        %v1164 = vpop.permute.xlu0 %1163
        %1165 = vrot.lane.b32.xlu0 %v1154, 127
        %v1166 = vpop.permute.xlu0 %1165
        %v1167 = vsel %vm618, %v1164, %v1166
        %v1168 = vsel %vm618, %v1166, %v1164
        %v1169 = vmul.f32 %v1167, %v476
        %v1170 = vmul.f32 %v1168, %v477
        %1172 = vset.pattern.permute.xlu0 0
        %1173 = vperm.xlu0 %1172, %v509
        %v1174 = vpop.permute.xlu0 %1173
        %v1176 = vmul.f32 %v1161, %v1174
        %v1177 = vmul.f32 %v1162, %v1174
        %1179 = vset.pattern.permute.xlu0 0
        %1180 = vperm.xlu0 %1179, %v510
        %v1181 = vpop.permute.xlu0 %1180
        %v1183 = vmul.f32 %v1153, %v1181
        %v1184 = vmul.f32 %v1154, %v1181
        %v1185 = vadd.f32 %v1176, %v1183
        %v1186 = vadd.f32 %v1177, %v1184
        %1188 = vset.pattern.permute.xlu0 0
        %1189 = vperm.xlu0 %1188, %v511
        %v1190 = vpop.permute.xlu0 %1189
        %v1192 = vmul.f32 %v1169, %v1190
        %v1193 = vmul.f32 %v1170, %v1190
        %v1194 = vadd.f32 %v1185, %v1192
        %v1195 = vadd.f32 %v1186, %v1193
        %1197 = vset.pattern.permute.xlu0 0
        %1198 = vperm.xlu0 %1197, %v512
        %v1199 = vpop.permute.xlu0 %1198
        %v1201 = vmul.f32 %v1161, %v1199
        %v1202 = vmul.f32 %v1162, %v1199
        %1204 = vset.pattern.permute.xlu0 0
        %1205 = vperm.xlu0 %1204, %v513
        %v1206 = vpop.permute.xlu0 %1205
        %v1208 = vmul.f32 %v1153, %v1206
        %v1209 = vmul.f32 %v1154, %v1206
        %v1210 = vadd.f32 %v1201, %v1208
        %v1211 = vadd.f32 %v1202, %v1209
        %1213 = vset.pattern.permute.xlu0 0
        %1214 = vperm.xlu0 %1213, %v514
        %v1215 = vpop.permute.xlu0 %1214
        %v1217 = vmul.f32 %v1169, %v1215
        %v1218 = vmul.f32 %v1170, %v1215
        %v1219 = vadd.f32 %v1210, %v1217
        %v1220 = vadd.f32 %v1211, %v1218
        %1222 = vset.pattern.permute.xlu0 0
        %1223 = vperm.xlu0 %1222, %v515
        %v1224 = vpop.permute.xlu0 %1223
        %v1226 = vmul.f32 %v1161, %v1224
        %v1227 = vmul.f32 %v1162, %v1224
        %1229 = vset.pattern.permute.xlu0 0
        %1230 = vperm.xlu0 %1229, %v516
        %v1231 = vpop.permute.xlu0 %1230
        %v1233 = vmul.f32 %v1153, %v1231
        %v1234 = vmul.f32 %v1154, %v1231
        %v1235 = vadd.f32 %v1226, %v1233
        %v1236 = vadd.f32 %v1227, %v1234
        %1238 = vset.pattern.permute.xlu0 0
        %1239 = vperm.xlu0 %1238, %v517
        %v1240 = vpop.permute.xlu0 %1239
        %v1242 = vmul.f32 %v1169, %v1240
        %v1243 = vmul.f32 %v1170, %v1240
        %v1244 = vadd.f32 %v1235, %v1242
        %v1245 = vadd.f32 %v1236, %v1243
        %1246 = vrot.lane.b32.xlu0 %v1194, 16
        %v1247 = vpop.permute.xlu0 %1246
        %1248 = vrot.lane.b32.xlu0 %v1195, 16
        %v1249 = vpop.permute.xlu0 %1248
        %v1250 = vsel %vm702, %v1247, %v1249
        %v1251 = vsel %vm702, %v1249, %v1247
        %v1252 = vmul.f32 %v1251, %v482
        %v1253 = vmul.f32 %v1250, %v483
        %v1254 = vadd.f32 %v1219, %v1252
        %v1255 = vadd.f32 %v1220, %v1253
        %1256 = vrot.lane.b32.xlu0 %v1244, 112
        %v1257 = vpop.permute.xlu0 %1256
        %1258 = vrot.lane.b32.xlu0 %v1245, 112
        %v1259 = vpop.permute.xlu0 %1258
        %v1260 = vsel %vm713, %v1257, %v1259
        %v1261 = vsel %vm713, %v1259, %v1257
        %v1262 = vmul.f32 %v1260, %v488
        %v1263 = vmul.f32 %v1261, %v489
        %v1264 = vadd.f32 %v1254, %v1262
        %v1265 = vadd.f32 %v1255, %v1263
        %1267 = vset.pattern.permute.xlu0 0
        %1268 = vperm.xlu0 %1267, %v518
        %v1269 = vpop.permute.xlu0 %1268
        %v1271 = vadd.f32 %v1264, %v1269
        %v1272 = vadd.f32 %v1265, %v1269
        %v1273 = vadd.f32 %v1153, %v519
        %v1274 = vadd.f32 %v1154, %v520
        %1275 = vst [vmem:[%s433] sm:$0xf] %v1273
        %1276 = vst [vmem:[%s433 + $0x8] sm:$0xf] %v1274
        %v1279 = vrot.slane %v519, 4
        %v1280 = vrot.slane %v520, 4
        %v1283 = vadd.f32 %v1271, %v1279
        %v1284 = vadd.f32 %v1272, %v1280
        %v1287 = vrot.slane %v1283, 4
        %v1288 = vrot.slane %v1284, 4
        %1291 = vst [vmem:[%s433] sm:$0xf0] %v1287
        %1292 = vst [vmem:[%s433 + $0x8] sm:$0xf0] %v1288
        %s1293 = sand.u32 %s313, 1
        %s1294 = scalar_lea.sflag [#allocation3], %s1293
        %s1295 = sand.u32 %s313, 1
        %s1296 = smul.addr %s1295, 16
        %s1297 = scalar_lea.vmem [#allocation2], %s1296
        // Predicated region
        $region73: #{tpu_custom_call.1} parent=71 // pred_check
          %p1298 = pneg %p323
        $region74: #{tpu_custom_call.1} parent=71 // pred_check_branch
          %1300 = sbr.rel (%p1298) target = $region76
        $region75: #{tpu_custom_call.1} parent=71 // pred_region
          %s1302 = ssub.s32 256, 256
          %1303 = vsyncadd %s1294, %s1302
          %s1304 = smul.addr %s27, 2
          %s1305 = smul.addr %s1304, 128
          %s1306 = scalar_lea.hbm %s13, %s1305
          %s1308 = sshll.u32 %s1297, 4
          %s1309 = int_to_ptr.vmem [resolvable:$true] %s1308
          %1311 = dma.vmem_to_hbm [thread:$0]  %s1309, 256, %s1306, %s1294
        $region76: #{tpu_custom_call.1} parent=71 // pred_fallthru
          _
      $region72: #{tpu_custom_call.1} parent=5 // pred_fallthru
        _
      %p1312 = scmp.le.s32.totalorder 2, %s22
      // Predicated region
      $region77: #{tpu_custom_call.1} parent=5 // pred_check
        %p1313 = pneg %p1312
      $region78: #{tpu_custom_call.1} parent=5 // pred_check_branch
        %1315 = sbr.rel (%p1313) target = $region80
      $region79: #{tpu_custom_call.1} parent=5 // pred_region
        %s1316 = ssub.s32 %s22, 2
        // Predicated region
        $region81: #{tpu_custom_call.1} parent=79 // pred_check
          %p1317 = pneg %p329
        $region82: #{tpu_custom_call.1} parent=79 // pred_check_branch
          %1319 = sbr.rel (%p1317) target = $region84
        $region83: #{tpu_custom_call.1} parent=79 // pred_region
          %s1320 = sand.u32 %s314, 1
          %s1321 = scalar_lea.sflag [#allocation3], %s1320
          %s1322 = sand.u32 %s314, 1
          %s1323 = smul.addr %s1322, 16
          %s1324 = scalar_lea.vmem [#allocation2], %s1323
          %1325 = dma.done %s1321, 256
        $region84: #{tpu_custom_call.1} parent=79 // pred_fallthru
          _
      $region80: #{tpu_custom_call.1} parent=5 // pred_fallthru
        _
    $region6: #{tpu_custom_call.1} parent=1 // loop_footer
      %s26 = sadd.s32 1, %s22
    $region7: #{tpu_custom_call.1} parent=1 // loop_footer_branch
      %21 = sbr.rel target = $region3
    $region8: #{tpu_custom_call.1} parent=1 // loop_exit
      _
    %1326 = vsyncpa [#allocation3], 1
    %s1327 = scalar_lea.sflag [#allocation3], 1
    %1328 = vsyncpa %s1327, 1

</llo_original>
